<compile_context>
chip_gen: v7x
topology: tpu7x:2x2x1
jax: 0.10.0
libtpu: 0.0.40
codegen_flags: <defaults>
</compile_context>

<pallas_src>
import functools
import math
from types import SimpleNamespace

import jax
import jax.numpy as jnp
import numpy as np
from jax import lax
from jax.experimental import pallas as pl
from jax.experimental.pallas import tpu as pltpu

_LANES = 128
_BF16_ROWS = 16  # bf16 sublane-packing granularity for weight-slab block offsets


def _round_up(n, m):
    return ((n + m - 1) // m) * m


# ----------------------------------------------------------------------------
# shared math (used by both the Pallas kernel and the pure-JAX reference)
# ----------------------------------------------------------------------------
def _bdot(a, w):
    """MXU matmul: bf16 operands, f32 accumulation."""
    return jnp.dot(a.astype(jnp.bfloat16), w.astype(jnp.bfloat16),
                   preferred_element_type=jnp.float32)


def _gru_combine(xi, hh, h_prev, H):
    """nn.GRUCell gate math on fused (r|z|n) pre-activations (biases included)."""
    r = jax.nn.sigmoid(xi[:, 0:H] + hh[:, 0:H])
    u = jax.nn.sigmoid(xi[:, H:2 * H] + hh[:, H:2 * H])
    n = jnp.tanh(xi[:, 2 * H:3 * H] + r * hh[:, 2 * H:3 * H])
    return (1.0 - u) * n + u * h_prev


def _phase1(x, dh_in, W, Bv, d):
    """f_percept -> (Mspace | Wrnn x-gates) -> Mrnn -> normalized goal g."""
    z = jnp.maximum(_bdot(x, W["Wp"]) + Bv["bp"], 0.0)           # relu(f_percept)
    zc = _bdot(z, W["Wz"]) + Bv["bz"]                            # [Mspace | Wrnn x-gates]
    s = zc[:, 0:d.Hm]
    w_xi = zc[:, d.Hm:d.Hm + 3 * d.Hr]                           # Wrnn x-side gates (w/ bias)

    m_xi = _bdot(s, W["MWi"]) + Bv["Mbi"]                        # Mrnn x-side gates
    m_hh = _bdot(dh_in, W["MWh"]) + Bv["Mbh"]                    # Mrnn h-side gates
    dh = _gru_combine(m_xi, m_hh, dh_in, d.Hd)                   # Mrnn

    g_raw = _bdot(dh, W["Wg"]) + Bv["bg"]                        # goal
    nsq = jnp.sum(g_raw * g_raw, axis=1, keepdims=True)
    g = g_raw * lax.rsqrt(jnp.maximum(nsq, 1e-24))               # unit-norm goal (EUP rsqrt)
    return w_xi, dh, g


def _phase2(g_mean, h_in, w_xi, W, Bv, d):
    """Wrnn -> U -> phi(goal mean) -> per-action logits."""
    w_hh = _bdot(h_in, W["WWh"]) + Bv["Wbh"]                     # Wrnn h-side gates
    h = _gru_combine(w_xi, w_hh, h_in, d.Hr)                     # Wrnn
    u = _bdot(h, W["Wu"]) + Bv["bu"]                             # U: [B, A*Wd]
    w_tiled = _bdot(g_mean, W["WphiT"])                          # phi with tile folded in
    logits = _bdot(u * w_tiled, W["Sel"])                        # [B, A] per-action contraction
    return h, logits


def _slab_views(w, layout):
    """w: Ref or array.  Static sub-slices (zero-cost views / direct VMEM loads)."""
    return {name: w[r0:r0 + r, 0:c] for name, (r0, r, c) in layout.items()}


def _bias_views(b, layout):
    return {name: b[r:r + 1, 0:c] for name, (r, c) in layout.items()}


# ----------------------------------------------------------------------------
# Pallas kernel: full T-step rollout with in-kernel GBuffer ring
# ----------------------------------------------------------------------------
def _make_kernel(d, w_layout, b_layout, cap):
    Hd, Hr, G, A, Bp = d.Hd, d.Hr, d.G, d.A, d.Bp
    pad_w = d.OUT_W - (Hd + Hr + G + A)

    def kernel(n0_ref,                                   # scalar prefetch (SMEM)
               x_ref, dh0_ref, h0_ref, ring0_ref, gsum0_ref, w_ref, b_ref,   # inputs
               out_ref, ring_ref, gsum_ref,              # outputs (ring/gsum constant-index)
               dh_s, h_s):                               # VMEM scratch carries
        t = pl.program_id(0)

        @pl.when(t == 0)
        def _init():
            dh_s[...] = dh0_ref[...]
            h_s[...] = h0_ref[...]
            ring_ref[...] = ring0_ref[...]
            gsum_ref[...] = gsum0_ref[...]

        W = _slab_views(w_ref, w_layout)
        Bv = _bias_views(b_ref, b_layout)

        x = x_ref[0]                                     # (Bp, Din), bf16
        dh_in = dh_s[...]
        h_in = h_s[...]

        w_xi, dh, g = _phase1(x, dh_in, W, Bv, d)

        # ---- GBuffer (put-then-mean): pop oldest when full, push g, running sum ----
        n_before = n0_ref[0] + t                         # goals stored before this put

        @pl.when(n_before >= cap)
        def _pop():
            gsum_ref[...] = gsum_ref[...] - ring_ref[0]  # drop oldest goal

        if cap > 1:                                      # shift ring (newest at slot cap-1)
            ring_ref[0:cap - 1] = ring_ref[1:cap]
        ring_ref[cap - 1] = g
        gsum_ref[...] = gsum_ref[...] + g
        count = jnp.minimum(n_before + 1, cap).astype(jnp.float32)
        g_mean = gsum_ref[...] / count                   # GBuffer.mean()

        h, logits = _phase2(g_mean, h_in, w_xi, W, Bv, d)

        dh_s[...] = dh
        h_s[...] = h

        # single lane-dense (Bp, 128) store: [dh | h | g | logits | zero pad]
        zero_pad = jnp.zeros((Bp, pad_w), jnp.float32)
        out_ref[0] = jnp.concatenate([dh, h, g, logits, zero_pad], axis=-1)

    return kernel


def _rollout_device(call, d, n0, xs, dh0, h0, ring, gsum, w_slab, b_slab):
    """jit-compiled device path: pad rows once -> pallas_call -> slice outputs."""
    padB = d.Bp - d.B
    xs_p = jnp.pad(xs.astype(jnp.bfloat16), ((0, 0), (0, padB), (0, 0)))
    dh0_p = jnp.pad(dh0.astype(jnp.float32), ((0, padB), (0, 0)))
    h0_p = jnp.pad(h0.astype(jnp.float32), ((0, padB), (0, 0)))

    out_seq, ring_new, gsum_new = call(n0, xs_p, dh0_p, h0_p, ring, gsum, w_slab, b_slab)

    B = d.B
    dh_seq = out_seq[:, :B, 0:d.Hd]
    h_seq = out_seq[:, :B, d.Hd:d.Hd + d.Hr]
    g_seq = out_seq[:, :B, d.Hd + d.Hr:d.Hd + d.Hr + d.G]
    o = d.Hd + d.Hr + d.G
    logits_seq = out_seq[:, :B, o:o + d.A]
    return g_seq, logits_seq, dh_seq, h_seq, ring_new, gsum_new


# ----------------------------------------------------------------------------
# Wrapper module (parameters + device-resident GBuffer + pallas_call plumbing)
# ----------------------------------------------------------------------------
class FuNAgentPallas:
    def __init__(self, input_shape, args, key):
        self.args = args
        B = args.batch_size * args.n_agents
        Bp = _round_up(max(B, 8), 8)                 # pad to full sublane group
        Hp, Hm = args.percept_hidden_dim, args.Msapce_hidden_dim
        Hd, Hr = args.drnn_hidden_dim, args.rnn_hidden_dim
        G, Wd, A = args.n_goals, args.W_dim, args.n_actions
        Din = input_shape
        self.B, self.Bp = B, Bp
        self.capacity = args.n_layers
        assert self.capacity >= 1

        assert Hm + 3 * Hr <= _LANES, "fused Mspace+Wrnn-input matmul must fit 128 lanes"
        for out_dim in (Hp, 3 * Hd, 3 * Hr, G, Wd * A, A):
            assert out_dim <= _LANES

        keys = iter(jax.random.split(key, 64))

        def uni(shape, bound):
            return np.asarray(
                jax.random.uniform(next(keys), shape, jnp.float32, -bound, bound))

        def linear(fan_in, fan_out, bias=True):
            b = 1.0 / math.sqrt(fan_in)
            W = uni((fan_in, fan_out), b)
            return (W, uni((fan_out,), b)) if bias else W

        def gru(in_dim, hid):
            b = 1.0 / math.sqrt(hid)
            Wi = uni((in_dim, 3 * hid), b)   # fused [in, r|z|n]
            Wh = uni((hid, 3 * hid), b)      # fused [hid, r|z|n]
            bi = uni((3 * hid,), b)
            bh = uni((3 * hid,), b)
            return Wi, Wh, bi, bh

        Wp, bp = linear(Din, Hp)
        Wm, bm = linear(Hp, Hm)
        MWi, MWh, Mbi, Mbh = gru(Hm, Hd)
        Wg, bg = linear(Hd, G)
        WWi, WWh, Wbi, Wbh = gru(Hp, Hr)
        Wu, bu = linear(Hr, Wd * A)
        Wphi = linear(G, Wd, bias=False)

        # Fold the Wd -> A*Wd broadcast into phi; build the per-action selector.
        WphiT = np.tile(Wphi, (1, A))                                            # [G, A*Wd]
        Sel = np.kron(np.eye(A, dtype=np.float32), np.ones((Wd, 1), np.float32))  # [A*Wd, A]
        # Fuse Mspace with the Wrnn input-gate matmul (both consume z).
        Wz = np.concatenate([Wm, WWi], axis=1)                                   # [Hp, Hm+3Hr]
        bz = np.concatenate([bm, Wbi], axis=0)                                   # [Hm+3Hr]

        # ---- pack all weights into ONE bf16 [R,128] slab --------------------------
        blocks = [("Wp", Wp), ("Wz", Wz), ("MWi", MWi), ("MWh", MWh),
                  ("Wg", Wg), ("WWh", WWh), ("Wu", Wu), ("WphiT", WphiT), ("Sel", Sel)]
        w_layout, rows, off = {}, [], 0
        for name, Wb in blocks:
            r, c = Wb.shape
            rp = _round_up(r, _BF16_ROWS)
            padded = np.zeros((rp, _LANES), np.float32)
            padded[:r, :c] = Wb
            rows.append(padded)
            w_layout[name] = (off, r, c)
            off += rp
        self.w_slab = jnp.asarray(np.concatenate(rows, axis=0), jnp.bfloat16)
        self.w_layout = w_layout

        # ---- pack all biases into ONE f32 [8,128] slab -----------------------------
        bias_rows = [("bp", bp), ("bz", bz), ("Mbi", Mbi), ("Mbh", Mbh),
                     ("Wbh", Wbh), ("bg", bg), ("bu", bu)]
        nb = _round_up(len(bias_rows), 8)
        b_np = np.zeros((nb, _LANES), np.float32)
        b_layout = {}
        for i, (name, bvec) in enumerate(bias_rows):
            b_np[i, :bvec.shape[0]] = bvec
            b_layout[name] = (i, int(bvec.shape[0]))
        self.b_slab = jnp.asarray(b_np)
        self.b_layout = b_layout

        out_w = _round_up(Hd + Hr + G + A, _LANES)
        self.d = SimpleNamespace(
            B=B, Bp=Bp, Din=Din, Hp=Hp, Hm=Hm, Hd=Hd, Hr=Hr, G=G, Wd=Wd, A=A,
            OUT_W=out_w)

        # device-resident GBuffer state (ring of last `capacity` goals + running sum)
        self._ring = jnp.zeros((self.capacity, Bp, G), jnp.float32)
        self._gsum = jnp.zeros((Bp, G), jnp.float32)
        self._gbuf_n = 0                 # fill level (plain Python int, no device sync)
        self._calls = {}                 # T -> jitted rollout function

    # ------------------------------------------------------------------ builders --
    def _build_rollout(self, T):
        d, cap = self.d, self.capacity
        R = self.w_slab.shape[0]
        NB = self.b_slab.shape[0]

        grid_spec = pltpu.PrefetchScalarGridSpec(
            num_scalar_prefetch=1,                       # n0: GBuffer fill level
            grid=(T,),
            in_specs=[
                pl.BlockSpec((1, d.Bp, d.Din), lambda t, n0: (t, 0, 0)),   # x_t (pipelined)
                pl.BlockSpec((d.Bp, d.Hd),     lambda t, n0: (0, 0)),      # dh0
                pl.BlockSpec((d.Bp, d.Hr),     lambda t, n0: (0, 0)),      # h0
                pl.BlockSpec((cap, d.Bp, d.G), lambda t, n0: (0, 0, 0)),   # ring in
                pl.BlockSpec((d.Bp, d.G),      lambda t, n0: (0, 0)),      # gsum in
                pl.BlockSpec((R, _LANES),      lambda t, n0: (0, 0)),      # weight slab (once)
                pl.BlockSpec((NB, _LANES),     lambda t, n0: (0, 0)),      # bias slab (once)
            ],
            out_specs=[
                pl.BlockSpec((1, d.Bp, d.OUT_W), lambda t, n0: (t, 0, 0)),  # per-step slab
                pl.BlockSpec((cap, d.Bp, d.G),   lambda t, n0: (0, 0, 0)),  # ring out
                pl.BlockSpec((d.Bp, d.G),        lambda t, n0: (0, 0)),     # gsum out
            ],
            scratch_shapes=[pltpu.VMEM((d.Bp, d.Hd), jnp.float32),          # dh carry
                            pltpu.VMEM((d.Bp, d.Hr), jnp.float32)],         # h carry
        )

        mm = (d.Din * d.Hp + d.Hp * (d.Hm + 3 * d.Hr) + d.Hm * 3 * d.Hd
              + d.Hd * 3 * d.Hd + d.Hd * d.G + d.Hr * 3 * d.Hr
              + d.Hr * d.Wd * d.A + d.G * d.Wd * d.A + d.Wd * d.A * d.A)
        cost = pl.CostEstimate(
            flops=int(2 * d.Bp * mm * T),
            transcendentals=int(d.Bp * (3 * (d.Hd + d.Hr) + 1) * T),
            bytes_accessed=int(self.w_slab.size * 2 + self.b_slab.size * 4
                               + T * (d.Bp * d.Din * 2 + d.Bp * d.OUT_W * 4)
                               + (2 * (cap + 1) * d.Bp * d.G
                                  + d.Bp * (d.Hd + d.Hr)) * 4))

        call = pl.pallas_call(
            _make_kernel(d, self.w_layout, self.b_layout, cap),
            grid_spec=grid_spec,
            out_shape=(
                jax.ShapeDtypeStruct((T, d.Bp, d.OUT_W), jnp.float32),
                jax.ShapeDtypeStruct((cap, d.Bp, d.G), jnp.float32),
                jax.ShapeDtypeStruct((d.Bp, d.G), jnp.float32),
            ),
            compiler_params=pltpu.CompilerParams(
                dimension_semantics=("arbitrary",)),       # recurrent time axis
            cost_estimate=cost,
        )
        return jax.jit(functools.partial(_rollout_device, call, d))

    def _rollout_fn(self, T):
        if T not in self._calls:
            self._calls[T] = self._build_rollout(T)
        return self._calls[T]

    # ------------------------------------------------------------------ state -----
    def init_hidden(self):
        a = self.args
        return ([jnp.zeros((self.B, a.drnn_hidden_dim), jnp.float32)
                 for _ in range(a.n_layers)]
                + [jnp.zeros((self.B, a.rnn_hidden_dim), jnp.float32)])

    def reset_goal_buffer(self):
        self._ring = jnp.zeros_like(self._ring)
        self._gsum = jnp.zeros_like(self._gsum)
        self._gbuf_n = 0

    # ---------------------------------------------------------------- forward -----
    def forward_rollout(self, xs, hidden_states):
        """xs: [T, B, Din].  Runs T env steps in one pallas_call; updates the
        device-resident GBuffer ring; returns per-step (g, logits, dh, h)."""
        d = self.d
        T = int(xs.shape[0])
        dh0 = jnp.asarray(hidden_states[0]).reshape(-1, d.Hd)
        h0 = jnp.asarray(hidden_states[1]).reshape(-1, d.Hr)
        n0 = jnp.asarray([self._gbuf_n], jnp.int32)

        g_seq, logits_seq, dh_seq, h_seq, ring, gsum = self._rollout_fn(T)(
            n0, jnp.asarray(xs), dh0, h0, self._ring, self._gsum,
            self.w_slab, self.b_slab)

        self._ring, self._gsum = ring, gsum              # GBuffer.put(g.detach()) x T
        self._gbuf_n = min(self._gbuf_n + T, self.capacity)
        return g_seq, logits_seq, dh_seq, h_seq

    def forward(self, inputs, hidden_states):
        """Per-step API matching the PyTorch module (a T=1 rollout)."""
        g, logits, dh, h = self.forward_rollout(jnp.asarray(inputs)[None], hidden_states)
        return g[0], logits[0], dh[0], h[0]

    # --------------------------------------------------------------- reference ----
    def reference_rollout(self, xs, hidden_states, g_buffer=()):
        """Pure-JAX (no Pallas) reference: identical math, Python-list GBuffer."""
        d, cap = self.d, self.capacity
        W = _slab_views(self.w_slab, self.w_layout)
        Bv = _bias_views(self.b_slab, self.b_layout)
        dh = jnp.asarray(hidden_states[0]).reshape(-1, d.Hd).astype(jnp.float32)
        h = jnp.asarray(hidden_states[1]).reshape(-1, d.Hr).astype(jnp.float32)
        buf = list(g_buffer)
        gs, ls, dhs, hs = [], [], [], []
        for t in range(xs.shape[0]):
            x = jnp.asarray(xs[t], jnp.float32)
            w_xi, dh, g = _phase1(x, dh, W, Bv, d)
            if len(buf) == cap:
                buf.pop(0)
            buf.append(g)
            g_mean = sum(buf) / len(buf)
            h, logits = _phase2(g_mean, h, w_xi, W, Bv, d)
            gs.append(g); ls.append(logits); dhs.append(dh); hs.append(h)
        return jnp.stack(gs), jnp.stack(ls), jnp.stack(dhs), jnp.stack(hs), buf


# ----------------------------------------------------------------------------
if __name__ == "__main__":
    args = SimpleNamespace(
        batch_size=2,
        n_agents=2,
        percept_hidden_dim=32,
        Msapce_hidden_dim=32,
        drnn_hidden_dim=32,
        rnn_hidden_dim=32,
        n_goals=16,
        W_dim=16,
        n_actions=8,
        n_layers=3,
    )
    input_shape = 16
    B = args.batch_size * args.n_agents
    T = 5

    key = jax.random.PRNGKey(0)
    k_param, k_x = jax.random.split(key)

    agent = FuNAgentPallas(input_shape, args, k_param)
    hidden = agent.init_hidden()
    xs = jax.random.normal(k_x, (T, B, input_shape), jnp.float32)

    # Pure-JAX reference over all T steps (same math, Python-list GBuffer).
    g_r, l_r, dh_r, h_r, _ = agent.reference_rollout(xs, hidden)

    # Kernel: one fused 3-step rollout, then two per-step forward() calls.
    # This exercises the in-kernel GBuffer through fill-up and the pop/full
    # regime, plus hidden/ring state carry across pallas_call invocations.
    g1, l1, dh1, h1 = agent.forward_rollout(xs[:3], hidden)
    g4, l4, dh4, h4 = agent.forward(xs[3], [dh1[-1], h1[-1]])
    g5, l5, dh5, h5 = agent.forward(xs[4], [dh4, h4])
    jax.block_until_ready((g1, l1, dh1, h1, g4, l4, dh4, h4, g5, l5, dh5, h5))

    g_k = jnp.concatenate([g1, g4[None], g5[None]], axis=0)
    l_k = jnp.concatenate([l1, l4[None], l5[None]], axis=0)
    dh_k = jnp.concatenate([dh1, dh4[None], dh5[None]], axis=0)
    h_k = jnp.concatenate([h1, h4[None], h5[None]], axis=0)

    assert g_k.shape == (T, B, args.n_goals)
    assert l_k.shape == (T, B, args.n_actions)
    assert dh_k.shape == (T, B, args.drnn_hidden_dim)
    assert h_k.shape == (T, B, args.rnn_hidden_dim)

    for out, ref in ((g_k, g_r), (l_k, l_r), (dh_k, dh_r), (h_k, h_r)):
        np.testing.assert_allclose(np.asarray(out), np.asarray(ref),
                                   atol=3e-2, rtol=3e-2)

    print("KERNEL_OK")
</pallas_src>

<mosaic_0001>
module attributes {stable_mosaic.version = 11 : i64} {
  func.func @kernel(%arg0: i32, %arg1: memref<1xi32, #tpu.memory_space<smem>>, %arg2: memref<1x8x16xbf16, #tpu.memory_space<vmem>>, %arg3: memref<8x32xf32, #tpu.memory_space<vmem>>, %arg4: memref<8x32xf32, #tpu.memory_space<vmem>>, %arg5: memref<3x8x16xf32, #tpu.memory_space<vmem>>, %arg6: memref<8x16xf32, #tpu.memory_space<vmem>>, %arg7: memref<352x128xbf16, #tpu.memory_space<vmem>>, %arg8: memref<8x128xf32, #tpu.memory_space<vmem>>, %arg9: memref<1x8x128xf32, #tpu.memory_space<vmem>>, %arg10: memref<3x8x16xf32, #tpu.memory_space<vmem>>, %arg11: memref<8x16xf32, #tpu.memory_space<vmem>>, %arg12: memref<8x32xf32, #tpu.memory_space<vmem>>, %arg13: memref<8x32xf32, #tpu.memory_space<vmem>>) attributes {dimension_semantics = [#tpu.dimension_semantics<arbitrary>], iteration_bounds = array<i64: 3>, scalar_prefetch = 1 : i64, scratch_operands = 2 : i64, tpu.core_type = #tpu.core_type<tc>, window_params = [{transform_indices = @transform_0, window_bounds = array<i64: 1, 8, 16>}, {pipeline_mode = #tpu.pipeline_mode<synchronous>, transform_indices = @transform_1, window_bounds = array<i64: 8, 32>}, {pipeline_mode = #tpu.pipeline_mode<synchronous>, transform_indices = @transform_2, window_bounds = array<i64: 8, 32>}, {pipeline_mode = #tpu.pipeline_mode<synchronous>, transform_indices = @transform_3, window_bounds = array<i64: 3, 8, 16>}, {pipeline_mode = #tpu.pipeline_mode<synchronous>, transform_indices = @transform_4, window_bounds = array<i64: 8, 16>}, {pipeline_mode = #tpu.pipeline_mode<synchronous>, transform_indices = @transform_5, window_bounds = array<i64: 352, 128>}, {pipeline_mode = #tpu.pipeline_mode<synchronous>, transform_indices = @transform_6, window_bounds = array<i64: 8, 128>}, {transform_indices = @transform_7, window_bounds = array<i64: 1, 8, 128>}, {pipeline_mode = #tpu.pipeline_mode<synchronous>, transform_indices = @transform_8, window_bounds = array<i64: 3, 8, 16>}, {pipeline_mode = #tpu.pipeline_mode<synchronous>, transform_indices = @transform_9, window_bounds = array<i64: 8, 16>}]} {
    %c0_i32 = arith.constant 0 : i32
    %0 = arith.cmpi eq, %arg0, %c0_i32 : i32
    %1 = arith.extui %0 : i1 to i32
    %c0_i32_0 = arith.constant 0 : i32
    %2 = arith.cmpi ne, %1, %c0_i32_0 : i32
    scf.if %2 {
      %c0_68 = arith.constant 0 : index
      %c0_69 = arith.constant 0 : index
      %145 = vector.load %arg3[%c0_68, %c0_69] : memref<8x32xf32, #tpu.memory_space<vmem>>, vector<8x32xf32>
      %c0_70 = arith.constant 0 : index
      %c0_71 = arith.constant 0 : index
      %146 = vector.load %arg12[%c0_70, %c0_71] : memref<8x32xf32, #tpu.memory_space<vmem>>, vector<8x32xf32>
      tpu.vector_store %arg12[%c0_70, %c0_71], %145 {strides = array<i32>} : memref<8x32xf32, #tpu.memory_space<vmem>>, vector<8x32xf32>,
      %c0_72 = arith.constant 0 : index
      %c0_73 = arith.constant 0 : index
      %147 = vector.load %arg4[%c0_72, %c0_73] : memref<8x32xf32, #tpu.memory_space<vmem>>, vector<8x32xf32>
      %c0_74 = arith.constant 0 : index
      %c0_75 = arith.constant 0 : index
      %148 = vector.load %arg13[%c0_74, %c0_75] : memref<8x32xf32, #tpu.memory_space<vmem>>, vector<8x32xf32>
      tpu.vector_store %arg13[%c0_74, %c0_75], %147 {strides = array<i32>} : memref<8x32xf32, #tpu.memory_space<vmem>>, vector<8x32xf32>,
      %c0_76 = arith.constant 0 : index
      %c0_77 = arith.constant 0 : index
      %c0_78 = arith.constant 0 : index
      %149 = vector.load %arg5[%c0_76, %c0_77, %c0_78] : memref<3x8x16xf32, #tpu.memory_space<vmem>>, vector<3x8x16xf32>
      %c0_79 = arith.constant 0 : index
      %c0_80 = arith.constant 0 : index
      %c0_81 = arith.constant 0 : index
      %150 = vector.load %arg10[%c0_79, %c0_80, %c0_81] : memref<3x8x16xf32, #tpu.memory_space<vmem>>, vector<3x8x16xf32>
      tpu.vector_store %arg10[%c0_79, %c0_80, %c0_81], %149 {strides = array<i32>} : memref<3x8x16xf32, #tpu.memory_space<vmem>>, vector<3x8x16xf32>,
      %c0_82 = arith.constant 0 : index
      %c0_83 = arith.constant 0 : index
      %151 = vector.load %arg6[%c0_82, %c0_83] : memref<8x16xf32, #tpu.memory_space<vmem>>, vector<8x16xf32>
      %c0_84 = arith.constant 0 : index
      %c0_85 = arith.constant 0 : index
      %152 = vector.load %arg11[%c0_84, %c0_85] : memref<8x16xf32, #tpu.memory_space<vmem>>, vector<8x16xf32>
      tpu.vector_store %arg11[%c0_84, %c0_85], %151 {strides = array<i32>} : memref<8x16xf32, #tpu.memory_space<vmem>>, vector<8x16xf32>,
    } else {
    }
    %c0 = arith.constant 0 : index
    %c0_1 = arith.constant 0 : index
    %3 = vector.load %arg7[%c0, %c0_1] : memref<352x128xbf16, #tpu.memory_space<vmem>>, vector<16x32xbf16>
    %c16 = arith.constant 16 : index
    %c0_2 = arith.constant 0 : index
    %4 = vector.load %arg7[%c16, %c0_2] : memref<352x128xbf16, #tpu.memory_space<vmem>>, vector<32x128xbf16>
    %c48 = arith.constant 48 : index
    %c0_3 = arith.constant 0 : index
    %5 = vector.load %arg7[%c48, %c0_3] : memref<352x128xbf16, #tpu.memory_space<vmem>>, vector<32x96xbf16>
    %c80 = arith.constant 80 : index
    %c0_4 = arith.constant 0 : index
    %6 = vector.load %arg7[%c80, %c0_4] : memref<352x128xbf16, #tpu.memory_space<vmem>>, vector<32x96xbf16>
    %c112 = arith.constant 112 : index
    %c0_5 = arith.constant 0 : index
    %7 = vector.load %arg7[%c112, %c0_5] : memref<352x128xbf16, #tpu.memory_space<vmem>>, vector<32x16xbf16>
    %c144 = arith.constant 144 : index
    %c0_6 = arith.constant 0 : index
    %8 = vector.load %arg7[%c144, %c0_6] : memref<352x128xbf16, #tpu.memory_space<vmem>>, vector<32x96xbf16>
    %c176 = arith.constant 176 : index
    %c0_7 = arith.constant 0 : index
    %9 = vector.load %arg7[%c176, %c0_7] : memref<352x128xbf16, #tpu.memory_space<vmem>>, vector<32x128xbf16>
    %c208 = arith.constant 208 : index
    %c0_8 = arith.constant 0 : index
    %10 = vector.load %arg7[%c208, %c0_8] : memref<352x128xbf16, #tpu.memory_space<vmem>>, vector<16x128xbf16>
    %c224 = arith.constant 224 : index
    %c0_9 = arith.constant 0 : index
    %11 = vector.load %arg7[%c224, %c0_9] : memref<352x128xbf16, #tpu.memory_space<vmem>>, vector<128x8xbf16>
    %c0_10 = arith.constant 0 : index
    %c0_11 = arith.constant 0 : index
    %12 = vector.load %arg8[%c0_10, %c0_11] : memref<8x128xf32, #tpu.memory_space<vmem>>, vector<1x32xf32>
    %c1 = arith.constant 1 : index
    %c0_12 = arith.constant 0 : index
    %13 = vector.load %arg8[%c1, %c0_12] : memref<8x128xf32, #tpu.memory_space<vmem>>, vector<1x128xf32>
    %c2 = arith.constant 2 : index
    %c0_13 = arith.constant 0 : index
    %14 = vector.load %arg8[%c2, %c0_13] : memref<8x128xf32, #tpu.memory_space<vmem>>, vector<1x96xf32>
    %c3 = arith.constant 3 : index
    %c0_14 = arith.constant 0 : index
    %15 = vector.load %arg8[%c3, %c0_14] : memref<8x128xf32, #tpu.memory_space<vmem>>, vector<1x96xf32>
    %c4 = arith.constant 4 : index
    %c0_15 = arith.constant 0 : index
    %16 = vector.load %arg8[%c4, %c0_15] : memref<8x128xf32, #tpu.memory_space<vmem>>, vector<1x96xf32>
    %c5 = arith.constant 5 : index
    %c0_16 = arith.constant 0 : index
    %17 = vector.load %arg8[%c5, %c0_16] : memref<8x128xf32, #tpu.memory_space<vmem>>, vector<1x16xf32>
    %c6 = arith.constant 6 : index
    %c0_17 = arith.constant 0 : index
    %18 = vector.load %arg8[%c6, %c0_17] : memref<8x128xf32, #tpu.memory_space<vmem>>, vector<1x128xf32>
    %c0_18 = arith.constant 0 : index
    %c0_19 = arith.constant 0 : index
    %c0_20 = arith.constant 0 : index
    %19 = vector.load %arg2[%c0_18, %c0_19, %c0_20] : memref<1x8x16xbf16, #tpu.memory_space<vmem>>, vector<1x8x16xbf16>
    %20 = vector.shape_cast %19 : vector<1x8x16xbf16> to vector<8x16xbf16>
    %c0_21 = arith.constant 0 : index
    %c0_22 = arith.constant 0 : index
    %21 = vector.load %arg12[%c0_21, %c0_22] : memref<8x32xf32, #tpu.memory_space<vmem>>, vector<8x32xf32>
    %c0_23 = arith.constant 0 : index
    %c0_24 = arith.constant 0 : index
    %22 = vector.load %arg13[%c0_23, %c0_24] : memref<8x32xf32, #tpu.memory_space<vmem>>, vector<8x32xf32>
    %cst = arith.constant dense<0.000000e+00> : vector<8x32xf32>
    %23 = tpu.matmul %20, %3, %cst {dimension_numbers = #tpu.dot_dimension_numbers<[1], [0], [0], [1], [0, 0, 1, 1], [], []>} : vector<8x16xbf16>, vector<16x32xbf16>, vector<8x32xf32> -> vector<8x32xf32>
    %24 = vector.broadcast %12 : vector<1x32xf32> to vector<8x32xf32>
    %25 = arith.addf %23, %24 : vector<8x32xf32>
    %cst_25 = arith.constant 0.000000e+00 : f32
    %26 = vector.broadcast %cst_25 : f32 to vector<8x32xf32>
    %27 = arith.maximumf %25, %26 : vector<8x32xf32>
    %28 = arith.truncf %27 : vector<8x32xf32> to vector<8x32xbf16>
    %cst_26 = arith.constant dense<0.000000e+00> : vector<8x128xf32>
    %29 = tpu.matmul %28, %4, %cst_26 {dimension_numbers = #tpu.dot_dimension_numbers<[1], [0], [0], [1], [0, 0, 1, 1], [], []>} : vector<8x32xbf16>, vector<32x128xbf16>, vector<8x128xf32> -> vector<8x128xf32>
    %30 = vector.broadcast %13 : vector<1x128xf32> to vector<8x128xf32>
    %31 = arith.addf %29, %30 : vector<8x128xf32>
    %32 = vector.extract_strided_slice %31 {offsets = [0, 0], sizes = [8, 32], strides = [1, 1]} : vector<8x128xf32> to vector<8x32xf32>
    %33 = vector.extract_strided_slice %31 {offsets = [0, 32], sizes = [8, 96], strides = [1, 1]} : vector<8x128xf32> to vector<8x96xf32>
    %34 = arith.truncf %32 : vector<8x32xf32> to vector<8x32xbf16>
    %cst_27 = arith.constant dense<0.000000e+00> : vector<8x96xf32>
    %35 = tpu.matmul %34, %5, %cst_27 {dimension_numbers = #tpu.dot_dimension_numbers<[1], [0], [0], [1], [0, 0, 1, 1], [], []>} : vector<8x32xbf16>, vector<32x96xbf16>, vector<8x96xf32> -> vector<8x96xf32>
    %36 = vector.broadcast %14 : vector<1x96xf32> to vector<8x96xf32>
    %37 = arith.addf %35, %36 : vector<8x96xf32>
    %38 = arith.truncf %21 : vector<8x32xf32> to vector<8x32xbf16>
    %cst_28 = arith.constant dense<0.000000e+00> : vector<8x96xf32>
    %39 = tpu.matmul %38, %6, %cst_28 {dimension_numbers = #tpu.dot_dimension_numbers<[1], [0], [0], [1], [0, 0, 1, 1], [], []>} : vector<8x32xbf16>, vector<32x96xbf16>, vector<8x96xf32> -> vector<8x96xf32>
    %40 = vector.broadcast %15 : vector<1x96xf32> to vector<8x96xf32>
    %41 = arith.addf %39, %40 : vector<8x96xf32>
    %42 = vector.extract_strided_slice %37 {offsets = [0, 0], sizes = [8, 32], strides = [1, 1]} : vector<8x96xf32> to vector<8x32xf32>
    %43 = vector.extract_strided_slice %41 {offsets = [0, 0], sizes = [8, 32], strides = [1, 1]} : vector<8x96xf32> to vector<8x32xf32>
    %44 = arith.addf %42, %43 : vector<8x32xf32>
    %45 = arith.negf %44 : vector<8x32xf32>
    %46 = math.exp %45 : vector<8x32xf32>
    %cst_29 = arith.constant 1.000000e+00 : f32
    %47 = vector.broadcast %cst_29 : f32 to vector<8x32xf32>
    %48 = arith.addf %47, %46 : vector<8x32xf32>
    %49 = arith.divf %47, %48 : vector<8x32xf32>
    %50 = vector.extract_strided_slice %37 {offsets = [0, 32], sizes = [8, 32], strides = [1, 1]} : vector<8x96xf32> to vector<8x32xf32>
    %51 = vector.extract_strided_slice %41 {offsets = [0, 32], sizes = [8, 32], strides = [1, 1]} : vector<8x96xf32> to vector<8x32xf32>
    %52 = arith.addf %50, %51 : vector<8x32xf32>
    %53 = arith.negf %52 : vector<8x32xf32>
    %54 = math.exp %53 : vector<8x32xf32>
    %cst_30 = arith.constant 1.000000e+00 : f32
    %55 = vector.broadcast %cst_30 : f32 to vector<8x32xf32>
    %56 = arith.addf %55, %54 : vector<8x32xf32>
    %57 = arith.divf %55, %56 : vector<8x32xf32>
    %58 = vector.extract_strided_slice %37 {offsets = [0, 64], sizes = [8, 32], strides = [1, 1]} : vector<8x96xf32> to vector<8x32xf32>
    %59 = vector.extract_strided_slice %41 {offsets = [0, 64], sizes = [8, 32], strides = [1, 1]} : vector<8x96xf32> to vector<8x32xf32>
    %60 = arith.mulf %49, %59 : vector<8x32xf32>
    %61 = arith.addf %58, %60 : vector<8x32xf32>
    %62 = math.tanh %61 : vector<8x32xf32>
    %cst_31 = arith.constant 1.000000e+00 : f32
    %63 = vector.broadcast %cst_31 : f32 to vector<8x32xf32>
    %64 = arith.subf %63, %57 : vector<8x32xf32>
    %65 = arith.mulf %64, %62 : vector<8x32xf32>
    %66 = arith.mulf %57, %21 : vector<8x32xf32>
    %67 = arith.addf %65, %66 : vector<8x32xf32>
    %68 = arith.truncf %67 : vector<8x32xf32> to vector<8x32xbf16>
    %cst_32 = arith.constant dense<0.000000e+00> : vector<8x16xf32>
    %69 = tpu.matmul %68, %7, %cst_32 {dimension_numbers = #tpu.dot_dimension_numbers<[1], [0], [0], [1], [0, 0, 1, 1], [], []>} : vector<8x32xbf16>, vector<32x16xbf16>, vector<8x16xf32> -> vector<8x16xf32>
    %70 = vector.broadcast %17 : vector<1x16xf32> to vector<8x16xf32>
    %71 = arith.addf %69, %70 : vector<8x16xf32>
    %72 = arith.mulf %71, %71 : vector<8x16xf32>
    %cst_33 = arith.constant dense<0.000000e+00> : vector<8xf32>
    %73 = vector.multi_reduction <add>, %72, %cst_33 [1] : vector<8x16xf32> to vector<8xf32>
    %74 = vector.shape_cast %73 : vector<8xf32> to vector<8x1xf32>
    %cst_34 = arith.constant 1.000000e-24 : f32
    %75 = vector.broadcast %cst_34 : f32 to vector<8x1xf32>
    %76 = arith.maximumf %74, %75 : vector<8x1xf32>
    %77 = math.rsqrt %76 : vector<8x1xf32>
    %78 = vector.broadcast %77 : vector<8x1xf32> to vector<8x16xf32>
    %79 = arith.mulf %71, %78 : vector<8x16xf32>
    %c0_35 = arith.constant 0 : index
    %80 = memref.load %arg1[%c0_35] : memref<1xi32, #tpu.memory_space<smem>>
    %81 = arith.addi %80, %arg0 : i32
    %c3_i32 = arith.constant 3 : i32
    %82 = arith.cmpi sge, %81, %c3_i32 : i32
    %83 = arith.extui %82 : i1 to i32
    %c0_i32_36 = arith.constant 0 : i32
    %84 = arith.cmpi ne, %83, %c0_i32_36 : i32
    scf.if %84 {
      %c0_68 = arith.constant 0 : index
      %c0_69 = arith.constant 0 : index
      %145 = vector.load %arg11[%c0_68, %c0_69] : memref<8x16xf32, #tpu.memory_space<vmem>>, vector<8x16xf32>
      %c0_70 = arith.constant 0 : index
      %c0_71 = arith.constant 0 : index
      %c0_72 = arith.constant 0 : index
      %146 = vector.load %arg10[%c0_70, %c0_71, %c0_72] : memref<3x8x16xf32, #tpu.memory_space<vmem>>, vector<1x8x16xf32>
      %147 = vector.shape_cast %146 : vector<1x8x16xf32> to vector<8x16xf32>
      %148 = arith.subf %145, %147 : vector<8x16xf32>
      %c0_73 = arith.constant 0 : index
      %c0_74 = arith.constant 0 : index
      %149 = vector.load %arg11[%c0_73, %c0_74] : memref<8x16xf32, #tpu.memory_space<vmem>>, vector<8x16xf32>
      tpu.vector_store %arg11[%c0_73, %c0_74], %148 {strides = array<i32>} : memref<8x16xf32, #tpu.memory_space<vmem>>, vector<8x16xf32>,
    } else {
    }
    %c1_37 = arith.constant 1 : index
    %c0_38 = arith.constant 0 : index
    %c0_39 = arith.constant 0 : index
    %85 = vector.load %arg10[%c1_37, %c0_38, %c0_39] : memref<3x8x16xf32, #tpu.memory_space<vmem>>, vector<2x8x16xf32>
    %c0_40 = arith.constant 0 : index
    %c0_41 = arith.constant 0 : index
    %c0_42 = arith.constant 0 : index
    %86 = vector.load %arg10[%c0_40, %c0_41, %c0_42] : memref<3x8x16xf32, #tpu.memory_space<vmem>>, vector<2x8x16xf32>
    tpu.vector_store %arg10[%c0_40, %c0_41, %c0_42], %85 {strides = array<i32>} : memref<3x8x16xf32, #tpu.memory_space<vmem>>, vector<2x8x16xf32>,
    %c2_43 = arith.constant 2 : index
    %c0_44 = arith.constant 0 : index
    %c0_45 = arith.constant 0 : index
    %87 = vector.load %arg10[%c2_43, %c0_44, %c0_45] : memref<3x8x16xf32, #tpu.memory_space<vmem>>, vector<1x8x16xf32>
    %88 = vector.shape_cast %87 : vector<1x8x16xf32> to vector<8x16xf32>
    %89 = vector.shape_cast %79 : vector<8x16xf32> to vector<1x8x16xf32>
    tpu.vector_store %arg10[%c2_43, %c0_44, %c0_45], %89 {strides = array<i32>} : memref<3x8x16xf32, #tpu.memory_space<vmem>>, vector<1x8x16xf32>,
    %c0_46 = arith.constant 0 : index
    %c0_47 = arith.constant 0 : index
    %90 = vector.load %arg11[%c0_46, %c0_47] : memref<8x16xf32, #tpu.memory_space<vmem>>, vector<8x16xf32>
    %91 = arith.addf %90, %79 : vector<8x16xf32>
    %c0_48 = arith.constant 0 : index
    %c0_49 = arith.constant 0 : index
    %92 = vector.load %arg11[%c0_48, %c0_49] : memref<8x16xf32, #tpu.memory_space<vmem>>, vector<8x16xf32>
    tpu.vector_store %arg11[%c0_48, %c0_49], %91 {strides = array<i32>} : memref<8x16xf32, #tpu.memory_space<vmem>>, vector<8x16xf32>,
    %c1_i32 = arith.constant 1 : i32
    %93 = arith.addi %81, %c1_i32 : i32
    %c3_i32_50 = arith.constant 3 : i32
    %94 = arith.minsi %93, %c3_i32_50 : i32
    %95 = arith.sitofp %94 : i32 to f32
    %c0_51 = arith.constant 0 : index
    %c0_52 = arith.constant 0 : index
    %96 = vector.load %arg11[%c0_51, %c0_52] : memref<8x16xf32, #tpu.memory_space<vmem>>, vector<8x16xf32>
    %97 = vector.broadcast %95 : f32 to vector<8x16xf32>
    %98 = arith.divf %96, %97 : vector<8x16xf32>
    %99 = arith.truncf %22 : vector<8x32xf32> to vector<8x32xbf16>
    %cst_53 = arith.constant dense<0.000000e+00> : vector<8x96xf32>
    %100 = tpu.matmul %99, %8, %cst_53 {dimension_numbers = #tpu.dot_dimension_numbers<[1], [0], [0], [1], [0, 0, 1, 1], [], []>} : vector<8x32xbf16>, vector<32x96xbf16>, vector<8x96xf32> -> vector<8x96xf32>
    %101 = vector.broadcast %16 : vector<1x96xf32> to vector<8x96xf32>
    %102 = arith.addf %100, %101 : vector<8x96xf32>
    %103 = vector.extract_strided_slice %33 {offsets = [0, 0], sizes = [8, 32], strides = [1, 1]} : vector<8x96xf32> to vector<8x32xf32>
    %104 = vector.extract_strided_slice %102 {offsets = [0, 0], sizes = [8, 32], strides = [1, 1]} : vector<8x96xf32> to vector<8x32xf32>
    %105 = arith.addf %103, %104 : vector<8x32xf32>
    %106 = arith.negf %105 : vector<8x32xf32>
    %107 = math.exp %106 : vector<8x32xf32>
    %cst_54 = arith.constant 1.000000e+00 : f32
    %108 = vector.broadcast %cst_54 : f32 to vector<8x32xf32>
    %109 = arith.addf %108, %107 : vector<8x32xf32>
    %110 = arith.divf %108, %109 : vector<8x32xf32>
    %111 = vector.extract_strided_slice %33 {offsets = [0, 32], sizes = [8, 32], strides = [1, 1]} : vector<8x96xf32> to vector<8x32xf32>
    %112 = vector.extract_strided_slice %102 {offsets = [0, 32], sizes = [8, 32], strides = [1, 1]} : vector<8x96xf32> to vector<8x32xf32>
    %113 = arith.addf %111, %112 : vector<8x32xf32>
    %114 = arith.negf %113 : vector<8x32xf32>
    %115 = math.exp %114 : vector<8x32xf32>
    %cst_55 = arith.constant 1.000000e+00 : f32
    %116 = vector.broadcast %cst_55 : f32 to vector<8x32xf32>
    %117 = arith.addf %116, %115 : vector<8x32xf32>
    %118 = arith.divf %116, %117 : vector<8x32xf32>
    %119 = vector.extract_strided_slice %33 {offsets = [0, 64], sizes = [8, 32], strides = [1, 1]} : vector<8x96xf32> to vector<8x32xf32>
    %120 = vector.extract_strided_slice %102 {offsets = [0, 64], sizes = [8, 32], strides = [1, 1]} : vector<8x96xf32> to vector<8x32xf32>
    %121 = arith.mulf %110, %120 : vector<8x32xf32>
    %122 = arith.addf %119, %121 : vector<8x32xf32>
    %123 = math.tanh %122 : vector<8x32xf32>
    %cst_56 = arith.constant 1.000000e+00 : f32
    %124 = vector.broadcast %cst_56 : f32 to vector<8x32xf32>
    %125 = arith.subf %124, %118 : vector<8x32xf32>
    %126 = arith.mulf %125, %123 : vector<8x32xf32>
    %127 = arith.mulf %118, %22 : vector<8x32xf32>
    %128 = arith.addf %126, %127 : vector<8x32xf32>
    %129 = arith.truncf %128 : vector<8x32xf32> to vector<8x32xbf16>
    %cst_57 = arith.constant dense<0.000000e+00> : vector<8x128xf32>
    %130 = tpu.matmul %129, %9, %cst_57 {dimension_numbers = #tpu.dot_dimension_numbers<[1], [0], [0], [1], [0, 0, 1, 1], [], []>} : vector<8x32xbf16>, vector<32x128xbf16>, vector<8x128xf32> -> vector<8x128xf32>
    %131 = vector.broadcast %18 : vector<1x128xf32> to vector<8x128xf32>
    %132 = arith.addf %130, %131 : vector<8x128xf32>
    %133 = arith.truncf %98 : vector<8x16xf32> to vector<8x16xbf16>
    %cst_58 = arith.constant dense<0.000000e+00> : vector<8x128xf32>
    %134 = tpu.matmul %133, %10, %cst_58 {dimension_numbers = #tpu.dot_dimension_numbers<[1], [0], [0], [1], [0, 0, 1, 1], [], []>} : vector<8x16xbf16>, vector<16x128xbf16>, vector<8x128xf32> -> vector<8x128xf32>
    %135 = arith.mulf %132, %134 : vector<8x128xf32>
    %136 = arith.truncf %135 : vector<8x128xf32> to vector<8x128xbf16>
    %cst_59 = arith.constant dense<0.000000e+00> : vector<8x8xf32>
    %137 = tpu.matmul %136, %11, %cst_59 {dimension_numbers = #tpu.dot_dimension_numbers<[1], [0], [0], [1], [0, 0, 1, 1], [], []>} : vector<8x128xbf16>, vector<128x8xbf16>, vector<8x8xf32> -> vector<8x8xf32>
    %c0_60 = arith.constant 0 : index
    %c0_61 = arith.constant 0 : index
    %138 = vector.load %arg12[%c0_60, %c0_61] : memref<8x32xf32, #tpu.memory_space<vmem>>, vector<8x32xf32>
    tpu.vector_store %arg12[%c0_60, %c0_61], %67 {strides = array<i32>} : memref<8x32xf32, #tpu.memory_space<vmem>>, vector<8x32xf32>,
    %c0_62 = arith.constant 0 : index
    %c0_63 = arith.constant 0 : index
    %139 = vector.load %arg13[%c0_62, %c0_63] : memref<8x32xf32, #tpu.memory_space<vmem>>, vector<8x32xf32>
    tpu.vector_store %arg13[%c0_62, %c0_63], %128 {strides = array<i32>} : memref<8x32xf32, #tpu.memory_space<vmem>>, vector<8x32xf32>,
    %cst_64 = arith.constant 0.000000e+00 : f32
    %140 = vector.broadcast %cst_64 : f32 to vector<8x40xf32>
    %141 = tpu.concatenate %67, %128, %79, %137, %140 in 1 : vector<8x32xf32>, vector<8x32xf32>, vector<8x16xf32>, vector<8x8xf32>, vector<8x40xf32> -> vector<8x128xf32>
    %c0_65 = arith.constant 0 : index
    %c0_66 = arith.constant 0 : index
    %c0_67 = arith.constant 0 : index
    %142 = vector.load %arg9[%c0_65, %c0_66, %c0_67] : memref<1x8x128xf32, #tpu.memory_space<vmem>>, vector<1x8x128xf32>
    %143 = vector.shape_cast %142 : vector<1x8x128xf32> to vector<8x128xf32>
    %144 = vector.shape_cast %141 : vector<8x128xf32> to vector<1x8x128xf32>
    tpu.vector_store %arg9[%c0_65, %c0_66, %c0_67], %144 {strides = array<i32>} : memref<1x8x128xf32, #tpu.memory_space<vmem>>, vector<1x8x128xf32>,
    return
  }
  func.func @transform_0(%arg0: i32, %arg1: memref<1xi32, #tpu.memory_space<smem>>) -> (i32, i32, i32) {
    %c0_i32 = arith.constant 0 : i32
    %c0_i32_0 = arith.constant 0 : i32
    %c0_i32_1 = arith.constant 0 : i32
    return %arg0, %c0_i32, %c0_i32_0 : i32, i32, i32
  }
  func.func @transform_1(%arg0: i32, %arg1: memref<1xi32, #tpu.memory_space<smem>>) -> (i32, i32) {
    %c0_i32 = arith.constant 0 : i32
    %c0_i32_0 = arith.constant 0 : i32
    %c0_i32_1 = arith.constant 0 : i32
    return %c0_i32, %c0_i32_0 : i32, i32
  }
  func.func @transform_2(%arg0: i32, %arg1: memref<1xi32, #tpu.memory_space<smem>>) -> (i32, i32) {
    %c0_i32 = arith.constant 0 : i32
    %c0_i32_0 = arith.constant 0 : i32
    %c0_i32_1 = arith.constant 0 : i32
    return %c0_i32, %c0_i32_0 : i32, i32
  }
  func.func @transform_3(%arg0: i32, %arg1: memref<1xi32, #tpu.memory_space<smem>>) -> (i32, i32, i32) {
    %c0_i32 = arith.constant 0 : i32
    %c0_i32_0 = arith.constant 0 : i32
    %c0_i32_1 = arith.constant 0 : i32
    %c0_i32_2 = arith.constant 0 : i32
    return %c0_i32, %c0_i32_0, %c0_i32_1 : i32, i32, i32
  }
  func.func @transform_4(%arg0: i32, %arg1: memref<1xi32, #tpu.memory_space<smem>>) -> (i32, i32) {
    %c0_i32 = arith.constant 0 : i32
    %c0_i32_0 = arith.constant 0 : i32
    %c0_i32_1 = arith.constant 0 : i32
    return %c0_i32, %c0_i32_0 : i32, i32
  }
  func.func @transform_5(%arg0: i32, %arg1: memref<1xi32, #tpu.memory_space<smem>>) -> (i32, i32) {
    %c0_i32 = arith.constant 0 : i32
    %c0_i32_0 = arith.constant 0 : i32
    %c0_i32_1 = arith.constant 0 : i32
    return %c0_i32, %c0_i32_0 : i32, i32
  }
  func.func @transform_6(%arg0: i32, %arg1: memref<1xi32, #tpu.memory_space<smem>>) -> (i32, i32) {
    %c0_i32 = arith.constant 0 : i32
    %c0_i32_0 = arith.constant 0 : i32
    %c0_i32_1 = arith.constant 0 : i32
    return %c0_i32, %c0_i32_0 : i32, i32
  }
  func.func @transform_7(%arg0: i32, %arg1: memref<1xi32, #tpu.memory_space<smem>>) -> (i32, i32, i32) {
    %c0_i32 = arith.constant 0 : i32
    %c0_i32_0 = arith.constant 0 : i32
    %c0_i32_1 = arith.constant 0 : i32
    return %arg0, %c0_i32, %c0_i32_0 : i32, i32, i32
  }
  func.func @transform_8(%arg0: i32, %arg1: memref<1xi32, #tpu.memory_space<smem>>) -> (i32, i32, i32) {
    %c0_i32 = arith.constant 0 : i32
    %c0_i32_0 = arith.constant 0 : i32
    %c0_i32_1 = arith.constant 0 : i32
    %c0_i32_2 = arith.constant 0 : i32
    return %c0_i32, %c0_i32_0, %c0_i32_1 : i32, i32, i32
  }
  func.func @transform_9(%arg0: i32, %arg1: memref<1xi32, #tpu.memory_space<smem>>) -> (i32, i32) {
    %c0_i32 = arith.constant 0 : i32
    %c0_i32_0 = arith.constant 0 : i32
    %c0_i32_1 = arith.constant 0 : i32
    return %c0_i32, %c0_i32_0 : i32, i32
  }
}

</mosaic_0001>

<llo_original>
// kernel: _rollout_device.1
$region0: #{_rollout_device.1}
  #allocation0 [shape = 'u32[]', space=smem, size = 0x4, offset = 0x4, fixed_abs, tag = 'smem constant byte address 0x4 - core index']
  #allocation1 [shape = 'u32[144,128]{1,0:T(1,128)}', space=vmem, size = 0x12000, scoped, tag = 'internal scratch']
  #allocation2 [shape = 'f32[8,32]{1,0:T(8,128)}', space=vmem, size = 0x1000, scoped, tag = 'scratch operand']
  #allocation3 [shape = 'f32[8,32]{1,0:T(8,128)}', space=vmem, size = 0x1000, scoped, tag = 'scratch operand']
  #allocation4 [shape = 's32[1]{0}', space=sflag, size = 0x4, scoped, tag = 'scoped memory for _rollout_device.1']
  #allocation5 [shape = 's32[1]{0:T(128)S(6)}', space=smem, size = 0x200, scoped, tag = 'prefetched SMEM operand 0']
  %s0 = inlined_call_operand.<no memory space> [shape: s32[1], index: 0, kind: input, shape index: {}]
  %s1 = inlined_call_operand.vmem [shape: bf16[3,8,16], index: 1, kind: input, shape index: {}]
  %s2 = inlined_call_operand.vmem [shape: f32[8,32], index: 2, kind: input, shape index: {}]
  %s3 = inlined_call_operand.vmem [shape: f32[8,32], index: 3, kind: input, shape index: {}]
  %s4 = inlined_call_operand.vmem [shape: f32[3,8,16], index: 4, kind: input, shape index: {}]
  %s5 = inlined_call_operand.vmem [shape: f32[8,16], index: 5, kind: input, shape index: {}]
  %s6 = inlined_call_operand.hbm [shape: bf16[352,128], index: 6, kind: input, shape index: {}]
  %s7 = inlined_call_operand.vmem [shape: f32[8,128], index: 7, kind: input, shape index: {}]
  %s8 = inlined_call_operand.vmem [shape: f32[3,8,128], index: 8, kind: output, shape index: {0}]
  %s9 = inlined_call_operand.hbm [shape: f32[3,8,16], index: 9, kind: output, shape index: {1}]
  %s10 = inlined_call_operand.hbm [shape: f32[8,16], index: 10, kind: output, shape index: {2}]
  %11 = xla_tuple %s8, %s9, %s10
  %s12 = sld [smem:[#allocation0]]
  $region89: #{_rollout_device.1} parent=0
    _
  %s14 = ssub.s32 1, %s12
  %s15 = scalar_select 0, %s14, %s12
  %16 = sst [smem:[#allocation5]] %s0
  $region1: #{_rollout_device.1} parent=0
    #allocation6 [shape = 'u8[90112]{0}', space=vmem, size = 0x16000, scoped, tag = 'input window, operand 6, single buffered']
    #allocation7 [shape = 's32[2]{0}', space=sflag, size = 0x8, scoped, tag = 'scoped memory for _rollout_device.1']
    #allocation8 [shape = 's32[2]{0}', space=sflag, size = 0x8, scoped, tag = 'scoped memory for _rollout_device.1']
    #allocation9 [shape = 'u8[12288]{0}', space=vmem, size = 0x3000, scoped, tag = 'output window, operand 1, single buffered']
    #allocation10 [shape = 'u8[4096]{0}', space=vmem, size = 0x1000, scoped, tag = 'output window, operand 2, single buffered']
    #allocation11 [shape = 's32[1]{0}', space=sflag, size = 0x4, scoped, tag = 'scoped memory for _rollout_device.1']
    %17 = vsyncpa [#allocation7], 0
    %18 = vsyncpa [#allocation8], 0
    %19 = vsyncpa [#allocation11], 0
    loop: start=0, step=1, limit=5
    $region2: #{_rollout_device.1} parent=1 // loop_pre_header
      _
    $region3: #{_rollout_device.1} parent=1 // loop_header
      %s21 = sphi 0, %s25
      %p22 = scmp.ge.s32.totalorder %s21, 5
      %s31 = sphi 0, %s33
      %s34 = sphi 0, %s31
      %s35 = sphi 0, %s34
      %s51 = sphi 0, %s35
      %s55 = sphi 0, %s55
      %s57 = sphi 0, %s55
      %s58 = sphi 0, %s57
      %s72 = sphi 0, %s58
      %s76 = sphi 0, %s76
      %s78 = sphi 0, %s76
      %s79 = sphi 0, %s78
      %s93 = sphi 0, %s79
      %s97 = sphi 0, %s97
      %s99 = sphi 0, %s97
      %s100 = sphi 0, %s99
      %s114 = sphi 0, %s100
      %s118 = sphi 0, %s118
      %s120 = sphi 0, %s118
      %s121 = sphi 0, %s120
      %s135 = sphi 0, %s121
      %s139 = sphi 0, %s139
      %s141 = sphi 0, %s139
      %s142 = sphi 0, %s141
      %s156 = sphi 0, %s142
      %s160 = sphi 0, %s160
      %s162 = sphi 0, %s160
      %s163 = sphi 0, %s162
      %s177 = sphi 0, %s163
      %s183 = sphi 0, %s185
      %s186 = sphi 0, %s183
      %s187 = sphi 0, %s186
      %s203 = sphi 0, %s187
      %s207 = sphi 0, %s207
      %s209 = sphi 0, %s207
      %s210 = sphi 0, %s209
      %s224 = sphi 0, %s210
      %s228 = sphi 0, %s228
      %s230 = sphi 0, %s228
      %s231 = sphi 0, %s230
      %s245 = sphi 0, %s231
    $region4: #{_rollout_device.1} parent=1 // loop_header_branch
      %24 = sbr.rel (%p22) target = $region8
    $region5: #{_rollout_device.1} parent=1 // loop_body
      %s26 = ssub.s32 %s21, 1
      %s27 = ssub.s32 %s21, 2
      %s28 = sadd.s32 %s21, 1
      %s29 = ssub.s32 %s21, %s28
      %p30 = scmp.eq.s32.totalorder %s29, 0
      %s32 = sadd.s32 %s31, 1
      %s33 = scalar_select %p30, %s31, %s32
      %p36 = pneg %p30
      %p37 = scmp.eq.s32.totalorder %s21, 2
      %p38 = por %p36, %p37
      %p39 = scmp.ne.s32.totalorder %s31, %s34
      %p40 = scmp.eq.s32.totalorder %s21, 0
      %p41 = por %p39, %p40
      %p42 = scmp.ne.s32.totalorder %s31, %s34
      %p43 = scmp.eq.s32.totalorder %s26, 2
      %p44 = por %p42, %p43
      %p45 = scmp.ne.s32.totalorder %s34, %s35
      %p46 = scmp.eq.s32.totalorder %s26, 0
      %p47 = por %p45, %p46
      %p48 = scmp.ne.s32.totalorder %s34, %s35
      %p49 = scmp.eq.s32.totalorder %s27, 2
      %p50 = por %p48, %p49
      %p52 = scmp.ne.s32.totalorder %s35, %s51
      %p53 = scmp.eq.s32.totalorder %s27, 0
      %p54 = por %p52, %p53
      %s56 = sadd.s32 %s55, 1
      %p59 = scmp.eq.s32.totalorder %s21, 2
      %p60 = scmp.ne.s32.totalorder %s55, %s57
      %p61 = scmp.eq.s32.totalorder %s21, 0
      %p62 = por %p60, %p61
      %p63 = scmp.ne.s32.totalorder %s55, %s57
      %p64 = scmp.eq.s32.totalorder %s26, 2
      %p65 = por %p63, %p64
      %p66 = scmp.ne.s32.totalorder %s57, %s58
      %p67 = scmp.eq.s32.totalorder %s26, 0
      %p68 = por %p66, %p67
      %p69 = scmp.ne.s32.totalorder %s57, %s58
      %p70 = scmp.eq.s32.totalorder %s27, 2
      %p71 = por %p69, %p70
      %p73 = scmp.ne.s32.totalorder %s58, %s72
      %p74 = scmp.eq.s32.totalorder %s27, 0
      %p75 = por %p73, %p74
      %s77 = sadd.s32 %s76, 1
      %p80 = scmp.eq.s32.totalorder %s21, 2
      %p81 = scmp.ne.s32.totalorder %s76, %s78
      %p82 = scmp.eq.s32.totalorder %s21, 0
      %p83 = por %p81, %p82
      %p84 = scmp.ne.s32.totalorder %s76, %s78
      %p85 = scmp.eq.s32.totalorder %s26, 2
      %p86 = por %p84, %p85
      %p87 = scmp.ne.s32.totalorder %s78, %s79
      %p88 = scmp.eq.s32.totalorder %s26, 0
      %p89 = por %p87, %p88
      %p90 = scmp.ne.s32.totalorder %s78, %s79
      %p91 = scmp.eq.s32.totalorder %s27, 2
      %p92 = por %p90, %p91
      %p94 = scmp.ne.s32.totalorder %s79, %s93
      %p95 = scmp.eq.s32.totalorder %s27, 0
      %p96 = por %p94, %p95
      %s98 = sadd.s32 %s97, 1
      %p101 = scmp.eq.s32.totalorder %s21, 2
      %p102 = scmp.ne.s32.totalorder %s97, %s99
      %p103 = scmp.eq.s32.totalorder %s21, 0
      %p104 = por %p102, %p103
      %p105 = scmp.ne.s32.totalorder %s97, %s99
      %p106 = scmp.eq.s32.totalorder %s26, 2
      %p107 = por %p105, %p106
      %p108 = scmp.ne.s32.totalorder %s99, %s100
      %p109 = scmp.eq.s32.totalorder %s26, 0
      %p110 = por %p108, %p109
      %p111 = scmp.ne.s32.totalorder %s99, %s100
      %p112 = scmp.eq.s32.totalorder %s27, 2
      %p113 = por %p111, %p112
      %p115 = scmp.ne.s32.totalorder %s100, %s114
      %p116 = scmp.eq.s32.totalorder %s27, 0
      %p117 = por %p115, %p116
      %s119 = sadd.s32 %s118, 1
      %p122 = scmp.eq.s32.totalorder %s21, 2
      %p123 = scmp.ne.s32.totalorder %s118, %s120
      %p124 = scmp.eq.s32.totalorder %s21, 0
      %p125 = por %p123, %p124
      %p126 = scmp.ne.s32.totalorder %s118, %s120
      %p127 = scmp.eq.s32.totalorder %s26, 2
      %p128 = por %p126, %p127
      %p129 = scmp.ne.s32.totalorder %s120, %s121
      %p130 = scmp.eq.s32.totalorder %s26, 0
      %p131 = por %p129, %p130
      %p132 = scmp.ne.s32.totalorder %s120, %s121
      %p133 = scmp.eq.s32.totalorder %s27, 2
      %p134 = por %p132, %p133
      %p136 = scmp.ne.s32.totalorder %s121, %s135
      %p137 = scmp.eq.s32.totalorder %s27, 0
      %p138 = por %p136, %p137
      %s140 = sadd.s32 %s139, 1
      %p143 = scmp.eq.s32.totalorder %s21, 2
      %p144 = scmp.ne.s32.totalorder %s139, %s141
      %p145 = scmp.eq.s32.totalorder %s21, 0
      %p146 = por %p144, %p145
      %p147 = scmp.ne.s32.totalorder %s139, %s141
      %p148 = scmp.eq.s32.totalorder %s26, 2
      %p149 = por %p147, %p148
      %p150 = scmp.ne.s32.totalorder %s141, %s142
      %p151 = scmp.eq.s32.totalorder %s26, 0
      %p152 = por %p150, %p151
      %p153 = scmp.ne.s32.totalorder %s141, %s142
      %p154 = scmp.eq.s32.totalorder %s27, 2
      %p155 = por %p153, %p154
      %p157 = scmp.ne.s32.totalorder %s142, %s156
      %p158 = scmp.eq.s32.totalorder %s27, 0
      %p159 = por %p157, %p158
      %s161 = sadd.s32 %s160, 1
      %p164 = scmp.eq.s32.totalorder %s21, 2
      %p165 = scmp.ne.s32.totalorder %s160, %s162
      %p166 = scmp.eq.s32.totalorder %s21, 0
      %p167 = por %p165, %p166
      %p168 = scmp.ne.s32.totalorder %s160, %s162
      %p169 = scmp.eq.s32.totalorder %s26, 2
      %p170 = por %p168, %p169
      %p171 = scmp.ne.s32.totalorder %s162, %s163
      %p172 = scmp.eq.s32.totalorder %s26, 0
      %p173 = por %p171, %p172
      %p174 = scmp.ne.s32.totalorder %s162, %s163
      %p175 = scmp.eq.s32.totalorder %s27, 2
      %p176 = por %p174, %p175
      %p178 = scmp.ne.s32.totalorder %s163, %s177
      %p179 = scmp.eq.s32.totalorder %s27, 0
      %p180 = por %p178, %p179
      %s181 = ssub.s32 %s21, %s28
      %p182 = scmp.eq.s32.totalorder %s181, 0
      %s184 = sadd.s32 %s183, 1
      %s185 = scalar_select %p182, %s183, %s184
      %p188 = pneg %p182
      %p189 = scmp.eq.s32.totalorder %s21, 2
      %p190 = por %p188, %p189
      %p191 = scmp.ne.s32.totalorder %s183, %s186
      %p192 = scmp.eq.s32.totalorder %s21, 0
      %p193 = por %p191, %p192
      %p194 = scmp.ne.s32.totalorder %s183, %s186
      %p195 = scmp.eq.s32.totalorder %s26, 2
      %p196 = por %p194, %p195
      %p197 = scmp.ne.s32.totalorder %s186, %s187
      %p198 = scmp.eq.s32.totalorder %s26, 0
      %p199 = por %p197, %p198
      %p200 = scmp.ne.s32.totalorder %s186, %s187
      %p201 = scmp.eq.s32.totalorder %s27, 2
      %p202 = por %p200, %p201
      %p204 = scmp.ne.s32.totalorder %s187, %s203
      %p205 = scmp.eq.s32.totalorder %s27, 0
      %p206 = por %p204, %p205
      %s208 = sadd.s32 %s207, 1
      %p211 = scmp.eq.s32.totalorder %s21, 2
      %p212 = scmp.ne.s32.totalorder %s207, %s209
      %p213 = scmp.eq.s32.totalorder %s21, 0
      %p214 = por %p212, %p213
      %p215 = scmp.ne.s32.totalorder %s207, %s209
      %p216 = scmp.eq.s32.totalorder %s26, 2
      %p217 = por %p215, %p216
      %p218 = scmp.ne.s32.totalorder %s209, %s210
      %p219 = scmp.eq.s32.totalorder %s26, 0
      %p220 = por %p218, %p219
      %p221 = scmp.ne.s32.totalorder %s209, %s210
      %p222 = scmp.eq.s32.totalorder %s27, 2
      %p223 = por %p221, %p222
      %p225 = scmp.ne.s32.totalorder %s210, %s224
      %p226 = scmp.eq.s32.totalorder %s27, 0
      %p227 = por %p225, %p226
      %s229 = sadd.s32 %s228, 1
      %p232 = scmp.eq.s32.totalorder %s21, 2
      %p233 = scmp.ne.s32.totalorder %s228, %s230
      %p234 = scmp.eq.s32.totalorder %s21, 0
      %p235 = por %p233, %p234
      %p236 = scmp.ne.s32.totalorder %s228, %s230
      %p237 = scmp.eq.s32.totalorder %s26, 2
      %p238 = por %p236, %p237
      %p239 = scmp.ne.s32.totalorder %s230, %s231
      %p240 = scmp.eq.s32.totalorder %s26, 0
      %p241 = por %p239, %p240
      %p242 = scmp.ne.s32.totalorder %s230, %s231
      %p243 = scmp.eq.s32.totalorder %s27, 2
      %p244 = por %p242, %p243
      %p246 = scmp.ne.s32.totalorder %s231, %s245
      %p247 = scmp.eq.s32.totalorder %s27, 0
      %p248 = por %p246, %p247
      %p249 = scmp.le.s32.totalorder 1, %s21
      %p250 = scmp.lt.s32.totalorder %s21, 4
      %p251 = pnand %p249, %p250
      %p252 = pneg %p251
      // Predicated region
      $region9: #{_rollout_device.1} parent=5 // pred_check
        _
      $region10: #{_rollout_device.1} parent=5 // pred_check_branch
        %254 = sbr.rel (%p251) target = $region12
      $region11: #{_rollout_device.1} parent=5 // pred_region
        %s255 = ssub.s32 %s21, 1
        // Predicated region
        $region13: #{_rollout_device.1} parent=11 // pred_check
          %p256 = pneg %p68
        $region14: #{_rollout_device.1} parent=11 // pred_check_branch
          %258 = sbr.rel (%p256) target = $region16
        $region15: #{_rollout_device.1} parent=11 // pred_region
          _
        $region16: #{_rollout_device.1} parent=11 // pred_fallthru
          _
        // Predicated region
        $region17: #{_rollout_device.1} parent=11 // pred_check
          %p259 = pneg %p89
        $region18: #{_rollout_device.1} parent=11 // pred_check_branch
          %261 = sbr.rel (%p259) target = $region20
        $region19: #{_rollout_device.1} parent=11 // pred_region
          _
        $region20: #{_rollout_device.1} parent=11 // pred_fallthru
          _
        // Predicated region
        $region21: #{_rollout_device.1} parent=11 // pred_check
          %p262 = pneg %p110
        $region22: #{_rollout_device.1} parent=11 // pred_check_branch
          %264 = sbr.rel (%p262) target = $region24
        $region23: #{_rollout_device.1} parent=11 // pred_region
          _
        $region24: #{_rollout_device.1} parent=11 // pred_fallthru
          _
        // Predicated region
        $region25: #{_rollout_device.1} parent=11 // pred_check
          %p265 = pneg %p131
        $region26: #{_rollout_device.1} parent=11 // pred_check_branch
          %267 = sbr.rel (%p265) target = $region28
        $region27: #{_rollout_device.1} parent=11 // pred_region
          _
        $region28: #{_rollout_device.1} parent=11 // pred_fallthru
          _
        // Predicated region
        $region29: #{_rollout_device.1} parent=11 // pred_check
          %p268 = pneg %p152
        $region30: #{_rollout_device.1} parent=11 // pred_check_branch
          %270 = sbr.rel (%p268) target = $region32
        $region31: #{_rollout_device.1} parent=11 // pred_region
          %s272 = ssub.s32 2816, 2816
          %273 = vsyncadd [#allocation7], %s272
          %s274 = sshll.u32 [#allocation6], 4
          %s275 = int_to_ptr.vmem [resolvable:$true] %s274
          %280 = dma.hbm_to_vmem [thread:$0]  %s6, 2816, %s275, [#allocation7], 64, 64, 4
        $region32: #{_rollout_device.1} parent=11 // pred_fallthru
          _
        // Predicated region
        $region33: #{_rollout_device.1} parent=11 // pred_check
          %p281 = pneg %p173
        $region34: #{_rollout_device.1} parent=11 // pred_check_branch
          %283 = sbr.rel (%p281) target = $region36
        $region35: #{_rollout_device.1} parent=11 // pred_region
          _
        $region36: #{_rollout_device.1} parent=11 // pred_fallthru
          _
      $region12: #{_rollout_device.1} parent=5 // pred_fallthru
        _
      %p284 = scmp.lt.s32.totalorder %s21, 3
      // Predicated region
      $region37: #{_rollout_device.1} parent=5 // pred_check
        %p285 = pneg %p284
      $region38: #{_rollout_device.1} parent=5 // pred_check_branch
        %287 = sbr.rel (%p285) target = $region40
      $region39: #{_rollout_device.1} parent=5 // pred_region
        // Predicated region
        $region41: #{_rollout_device.1} parent=39 // pred_check
          %p288 = pneg %p41
        $region42: #{_rollout_device.1} parent=39 // pred_check_branch
          %290 = sbr.rel (%p288) target = $region44
        $region43: #{_rollout_device.1} parent=39 // pred_region
          %p291 = scmp.lt.s32.totalorder %s21, 2
          %s292 = scalar_select %p291, %s21, 2
          %s293 = smul.addr %s292, 4
          %s294 = scalar_lea.vmem %s1, %s293
        $region44: #{_rollout_device.1} parent=39 // pred_fallthru
          _
      $region40: #{_rollout_device.1} parent=5 // pred_fallthru
        _
      %p295 = scmp.le.s32.totalorder 1, %s21
      %p296 = scmp.lt.s32.totalorder %s21, 4
      %p297 = pnand %p295, %p296
      %p298 = pneg %p297
      // Predicated region
      $region45: #{_rollout_device.1} parent=5 // pred_check
        _
      $region46: #{_rollout_device.1} parent=5 // pred_check_branch
        %300 = sbr.rel (%p297) target = $region48
      $region47: #{_rollout_device.1} parent=5 // pred_region
        %s301 = ssub.s32 %s21, 1
        // Predicated region
        $region49: #{_rollout_device.1} parent=47 // pred_check
          %p302 = pneg %p152
        $region50: #{_rollout_device.1} parent=47 // pred_check_branch
          %304 = sbr.rel (%p302) target = $region52
        $region51: #{_rollout_device.1} parent=47 // pred_region
          %305 = dma.done [#allocation7], 2816
        $region52: #{_rollout_device.1} parent=47 // pred_fallthru
          _
        %p306 = scmp.lt.s32.totalorder %s26, 2
        %s307 = scalar_select %p306, %s26, 2
        %s308 = smul.addr %s307, 4
        %s309 = scalar_lea.vmem %s1, %s308
        %p310 = pneg %p47
        %p311 = pneg %p44
        %p312 = pneg %p68
        %p313 = pneg %p65
        %p314 = pneg %p89
        %p315 = pneg %p86
        %p316 = pneg %p110
        %p317 = pneg %p107
        %p318 = pneg %p131
        %p319 = pneg %p128
        %p320 = pneg %p152
        %p321 = pneg %p149
        %p322 = pneg %p173
        %p323 = pneg %p170
        %p324 = pneg %p199
        %p325 = pneg %p196
        %p326 = scmp.lt.s32.totalorder %s26, 2
        %s327 = scalar_select %p326, %s26, 2
        %s328 = smul.addr %s327, 8
        %s329 = scalar_lea.vmem %s8, %s328
        %p330 = pneg %p220
        %p331 = pneg %p217
        %p332 = pneg %p241
        %p333 = pneg %p238
        %p334 = scmp.lt.s32.totalorder %s26, 2
        %s335 = scalar_select %p334, %s26, 2
        %s336 = smul.addr %s335, 4
        %s337 = scalar_lea.vmem %s1, %s336
        %p338 = scmp.lt.s32.totalorder %s26, 2
        %s339 = scalar_select %p338, %s26, 2
        %s340 = smul.addr %s339, 8
        %s341 = scalar_lea.vmem %s8, %s340
        %p343 = scmp.eq.s32.totalorder %s26, 0
        // Predicated region
        $region53: #{_rollout_device.1} parent=47 // pred_check
          %p344 = pneg %p343
        $region54: #{_rollout_device.1} parent=47 // pred_check_branch
          %346 = sbr.rel (%p344) target = $region56
        $region55: #{_rollout_device.1} parent=47 // pred_region
          %v347 = vld [vmem:[%s2] sm:$0xff]
          %vm348 = vcmask 261120
          %349 = vst.msk [vmem:[#allocation2] sm:$0xff] %vm348, %v347
          %v350 = vld [vmem:[%s3] sm:$0xff]
          %351 = vst.msk [vmem:[#allocation3] sm:$0xff] %vm348, %v350
          %v352 = vld [vmem:[%s4] sm:$0xff]
          %v353 = vld [vmem:[%s4 + $0x8] sm:$0xff]
          %v354 = vld [vmem:[%s4 + $0x10] sm:$0xff]
          %vm355 = vcmask 130048
          %356 = vst.msk [vmem:[#allocation9] sm:$0xff] %vm355, %v352
          %357 = vst.msk [vmem:[#allocation9 + $0x8] sm:$0xff] %vm355, %v353
          %358 = vst.msk [vmem:[#allocation9 + $0x10] sm:$0xff] %vm355, %v354
          %v359 = vld [vmem:[%s5] sm:$0xff]
          %360 = vst.msk [vmem:[#allocation10] sm:$0xff] %vm355, %v359
        $region56: #{_rollout_device.1} parent=47 // pred_fallthru
          _
        %v361 = vld [vmem:[#allocation6] sm:$0xf]
        %v362 = vld [vmem:[#allocation6 + $0x4] sm:$0xf]
        %v363 = vld [vmem:[#allocation6 + $0x8] sm:$0xf]
        %v364 = vld [vmem:[#allocation6 + $0xc] sm:$0xf]
        %v365 = vld [vmem:[#allocation6 + $0x10] sm:$0xf]
        %v366 = vld [vmem:[#allocation6 + $0x14] sm:$0xf]
        %v367 = vld [vmem:[#allocation6 + $0x18] sm:$0xf]
        %v368 = vld [vmem:[#allocation6 + $0x1c] sm:$0xf]
        %v369 = vld [vmem:[#allocation6 + $0x20] sm:$0xf]
        %v370 = vld [vmem:[#allocation6 + $0x24] sm:$0xf]
        %v371 = vld [vmem:[#allocation6 + $0x28] sm:$0xf]
        %v372 = vld [vmem:[#allocation6 + $0x2c] sm:$0xf]
        %v373 = vld [vmem:[#allocation6 + $0x30] sm:$0xf]
        %v374 = vld [vmem:[#allocation6 + $0x34] sm:$0xf]
        %v375 = vld [vmem:[#allocation6 + $0x38] sm:$0xf]
        %v376 = vld [vmem:[#allocation6 + $0x3c] sm:$0xf]
        %v377 = vld [vmem:[#allocation6 + $0x40] sm:$0xf]
        %v378 = vld [vmem:[#allocation6 + $0x44] sm:$0xf]
        %v379 = vld [vmem:[#allocation6 + $0x48] sm:$0xf]
        %v380 = vld [vmem:[#allocation6 + $0x4c] sm:$0xf]
        %v381 = vld [vmem:[#allocation6 + $0x50] sm:$0xf]
        %v382 = vld [vmem:[#allocation6 + $0x54] sm:$0xf]
        %v383 = vld [vmem:[#allocation6 + $0x58] sm:$0xf]
        %v384 = vld [vmem:[#allocation6 + $0x5c] sm:$0xf]
        %v385 = vld [vmem:[#allocation6 + $0x60] sm:$0xf]
        %v386 = vld [vmem:[#allocation6 + $0x64] sm:$0xf]
        %v387 = vld [vmem:[#allocation6 + $0x68] sm:$0xf]
        %v388 = vld [vmem:[#allocation6 + $0x6c] sm:$0xf]
        %v389 = vld [vmem:[#allocation6 + $0x70] sm:$0xf]
        %v390 = vld [vmem:[#allocation6 + $0x74] sm:$0xf]
        %v391 = vld [vmem:[#allocation6 + $0x78] sm:$0xf]
        %v392 = vld [vmem:[#allocation6 + $0x7c] sm:$0xf]
        %v393 = vld [vmem:[#allocation6 + $0x80] sm:$0xf]
        %v394 = vld [vmem:[#allocation6 + $0x84] sm:$0xf]
        %v395 = vld [vmem:[#allocation6 + $0x88] sm:$0xf]
        %v396 = vld [vmem:[#allocation6 + $0x8c] sm:$0xf]
        %v397 = vld [vmem:[#allocation6 + $0x90] sm:$0xf]
        %v398 = vld [vmem:[#allocation6 + $0x94] sm:$0xf]
        %v399 = vld [vmem:[#allocation6 + $0x98] sm:$0xf]
        %v400 = vld [vmem:[#allocation6 + $0x9c] sm:$0xf]
        %v401 = vld [vmem:[#allocation6 + $0xa0] sm:$0xf]
        %v402 = vld [vmem:[#allocation6 + $0xa4] sm:$0xf]
        %v403 = vld [vmem:[#allocation6 + $0xa8] sm:$0xf]
        %v404 = vld [vmem:[#allocation6 + $0xac] sm:$0xf]
        %v405 = vld [vmem:[%s7] sm:$0x1]
        %v406 = vld [vmem:[%s7 + $0x1] sm:$0x1]
        %v407 = vld [vmem:[%s7 + $0x2] sm:$0x1]
        %v408 = vld [vmem:[%s7 + $0x3] sm:$0x1]
        %v409 = vld [vmem:[%s7 + $0x4] sm:$0x1]
        %v410 = vld [vmem:[%s7 + $0x5] sm:$0x1]
        %v411 = vld [vmem:[%s7 + $0x6] sm:$0x1]
        %v412 = vld [vmem:[%s337] sm:$0xf]
        %v413 = vld [vmem:[#allocation2] sm:$0xff]
        %v414 = vld [vmem:[#allocation3] sm:$0xff]
        %v415 = vlaneseq
        %v416 = vshrl.u32 %v415, 7
        %v417 = vsub.s32 0, %v416
        %v418 = vrot.slane %v405, %v417
        %v421 = vunpack.c.l.b16 %v361
        %v422 = vunpack.c.l.b16 %v362
        %v423 = vpack.c.b16 %v422, %v421
        %vm425 = vcmask 130048
        %v427 = vsel %vm425, %v412, 0
        %429 = vmatprep.subr.bf16.mxu0 0
        %430 = vmatpush1.bf16.msra.mxu0 %v423
        %431 = vmatprep.subr.bf16.mxu0 0
        %432 = vmatpush1.bf16.msra.mxu0 0
        %433 = vmatprep.subr.bf16.mxu0 0
        %434 = vmatpush1.bf16.msra.mxu0 0
        %435 = vmatprep.subr.bf16.mxu0 0
        %436 = vmatpush1.bf16.msra.mxu0 0
        %437 = vmatprep.subr.bf16.mxu0 0
        %438 = vmatpush1.bf16.msra.mxu0 0
        %439 = vmatprep.subr.bf16.mxu0 0
        %440 = vmatpush1.bf16.msra.mxu0 0
        %441 = vmatprep.subr.bf16.mxu0 0
        %442 = vmatpush1.bf16.msra.mxu0 0
        %443 = vmatprep.subr.bf16.mxu0 0
        %444 = vmatpush1.bf16.msra.mxu0 0
        %445 = vmatprep.subr.bf16.mxu0 0
        %446 = vmatpush1.bf16.msra.mxu0 0
        %447 = vmatprep.subr.bf16.mxu0 0
        %448 = vmatpush1.bf16.msra.mxu0 0
        %449 = vmatprep.subr.bf16.mxu0 0
        %450 = vmatpush1.bf16.msra.mxu0 0
        %451 = vmatprep.subr.bf16.mxu0 0
        %452 = vmatpush1.bf16.msra.mxu0 0
        %453 = vmatprep.subr.bf16.mxu0 0
        %454 = vmatpush1.bf16.msra.mxu0 0
        %455 = vmatprep.subr.bf16.mxu0 0
        %456 = vmatpush1.bf16.msra.mxu0 0
        %457 = vmatprep.subr.bf16.mxu0 0
        %458 = vmatpush1.bf16.msra.mxu0 0
        %459 = vmatprep.subr.bf16.mxu0 0
        %460 = vmatpush1.bf16.msra.mxu0 0
        %461 = vmatprep.mubr.bf16.mxu0 0
        %462 = vmatmul.mubr.bf16.gmra.mrb[0].mxu0 %v427
        %v463 = vpop.f32.mrb[0].mxu0
        %v464 = vadd.f32 %v418, %v463
        %v465 = vpop.f32.mrb[0].mxu0
        %v466 = vpop.f32.mrb[0].mxu0
        %v467 = vpop.f32.mrb[0].mxu0
        %468 = vdwg.mxu0
        %v469 = vmax.f32 %v464, 0.0
        %v470 = vpack.c.bf16 %v469, %v469
        %v471 = vlaneseq
        %v472 = vshrl.u32 %v471, 7
        %v473 = vsub.s32 0, %v472
        %v474 = vrot.slane %v406, %v473
        %v479 = vunpack.c.l.b16 %v363
        %v480 = vunpack.c.l.b16 %v364
        %v481 = vunpack.c.l.b16 %v365
        %v482 = vunpack.c.l.b16 %v366
        %v483 = vpack.c.b16 %v480, %v479
        %v484 = vpack.c.b16 %v482, %v481
        %vm487 = vcmask 261120
        %v489 = vsel %vm487, %v470, 0
        %491 = vmatprep.subr.bf16.mxu0 0
        %492 = vmatpush1.bf16.msra.mxu0 %v483
        %493 = vmatprep.subr.bf16.mxu0 0
        %494 = vmatpush1.bf16.msra.mxu0 %v484
        %495 = vmatprep.subr.bf16.mxu0 0
        %496 = vmatpush1.bf16.msra.mxu0 0
        %497 = vmatprep.subr.bf16.mxu0 0
        %498 = vmatpush1.bf16.msra.mxu0 0
        %499 = vmatprep.subr.bf16.mxu0 0
        %500 = vmatpush1.bf16.msra.mxu0 0
        %501 = vmatprep.subr.bf16.mxu0 0
        %502 = vmatpush1.bf16.msra.mxu0 0
        %503 = vmatprep.subr.bf16.mxu0 0
        %504 = vmatpush1.bf16.msra.mxu0 0
        %505 = vmatprep.subr.bf16.mxu0 0
        %506 = vmatpush1.bf16.msra.mxu0 0
        %507 = vmatprep.subr.bf16.mxu0 0
        %508 = vmatpush1.bf16.msra.mxu0 0
        %509 = vmatprep.subr.bf16.mxu0 0
        %510 = vmatpush1.bf16.msra.mxu0 0
        %511 = vmatprep.subr.bf16.mxu0 0
        %512 = vmatpush1.bf16.msra.mxu0 0
        %513 = vmatprep.subr.bf16.mxu0 0
        %514 = vmatpush1.bf16.msra.mxu0 0
        %515 = vmatprep.subr.bf16.mxu0 0
        %516 = vmatpush1.bf16.msra.mxu0 0
        %517 = vmatprep.subr.bf16.mxu0 0
        %518 = vmatpush1.bf16.msra.mxu0 0
        %519 = vmatprep.subr.bf16.mxu0 0
        %520 = vmatpush1.bf16.msra.mxu0 0
        %521 = vmatprep.subr.bf16.mxu0 0
        %522 = vmatpush1.bf16.msra.mxu0 0
        %523 = vmatprep.mubr.bf16.mxu0 0
        %524 = vmatmul.mubr.bf16.gmra.mrb[0].mxu0 %v489
        %v525 = vpop.f32.mrb[0].mxu0
        %v526 = vadd.f32 %v474, %v525
        %v527 = vpop.f32.mrb[0].mxu0
        %v528 = vpop.f32.mrb[0].mxu0
        %v529 = vpop.f32.mrb[0].mxu0
        %530 = vdwg.mxu0
        %v531 = vpack.c.bf16 %v526, %v526
        %v532 = vlaneseq
        %v533 = vshrl.u32 %v532, 7
        %v534 = vsub.s32 0, %v533
        %v535 = vrot.slane %v407, %v534
        %v540 = vunpack.c.l.b16 %v367
        %v541 = vunpack.c.l.b16 %v368
        %v542 = vunpack.c.l.b16 %v369
        %v543 = vunpack.c.l.b16 %v370
        %v544 = vpack.c.b16 %v541, %v540
        %v545 = vpack.c.b16 %v543, %v542
        %v549 = vsel %vm487, %v531, 0
        %551 = vmatprep.subr.bf16.mxu0 0
        %552 = vmatpush1.bf16.msra.mxu0 %v544
        %553 = vmatprep.subr.bf16.mxu0 0
        %554 = vmatpush1.bf16.msra.mxu0 %v545
        %555 = vmatprep.subr.bf16.mxu0 0
        %556 = vmatpush1.bf16.msra.mxu0 0
        %557 = vmatprep.subr.bf16.mxu0 0
        %558 = vmatpush1.bf16.msra.mxu0 0
        %559 = vmatprep.subr.bf16.mxu0 0
        %560 = vmatpush1.bf16.msra.mxu0 0
        %561 = vmatprep.subr.bf16.mxu0 0
        %562 = vmatpush1.bf16.msra.mxu0 0
        %563 = vmatprep.subr.bf16.mxu0 0
        %564 = vmatpush1.bf16.msra.mxu0 0
        %565 = vmatprep.subr.bf16.mxu0 0
        %566 = vmatpush1.bf16.msra.mxu0 0
        %567 = vmatprep.subr.bf16.mxu0 0
        %568 = vmatpush1.bf16.msra.mxu0 0
        %569 = vmatprep.subr.bf16.mxu0 0
        %570 = vmatpush1.bf16.msra.mxu0 0
        %571 = vmatprep.subr.bf16.mxu0 0
        %572 = vmatpush1.bf16.msra.mxu0 0
        %573 = vmatprep.subr.bf16.mxu0 0
        %574 = vmatpush1.bf16.msra.mxu0 0
        %575 = vmatprep.subr.bf16.mxu0 0
        %576 = vmatpush1.bf16.msra.mxu0 0
        %577 = vmatprep.subr.bf16.mxu0 0
        %578 = vmatpush1.bf16.msra.mxu0 0
        %579 = vmatprep.subr.bf16.mxu0 0
        %580 = vmatpush1.bf16.msra.mxu0 0
        %581 = vmatprep.subr.bf16.mxu0 0
        %582 = vmatpush1.bf16.msra.mxu0 0
        %583 = vmatprep.mubr.bf16.mxu0 0
        %584 = vmatmul.mubr.bf16.gmra.mrb[0].mxu0 %v549
        %v585 = vpop.f32.mrb[0].mxu0
        %v586 = vadd.f32 %v535, %v585
        %v587 = vpop.f32.mrb[0].mxu0
        %v588 = vpop.f32.mrb[0].mxu0
        %v589 = vpop.f32.mrb[0].mxu0
        %590 = vdwg.mxu0
        %v591 = vpack.c.bf16 %v413, %v413
        %v592 = vlaneseq
        %v593 = vshrl.u32 %v592, 7
        %v594 = vsub.s32 0, %v593
        %v595 = vrot.slane %v408, %v594
        %v600 = vunpack.c.l.b16 %v371
        %v601 = vunpack.c.l.b16 %v372
        %v602 = vunpack.c.l.b16 %v373
        %v603 = vunpack.c.l.b16 %v374
        %v604 = vpack.c.b16 %v601, %v600
        %v605 = vpack.c.b16 %v603, %v602
        %v609 = vsel %vm487, %v591, 0
        %611 = vmatprep.subr.bf16.mxu0 0
        %612 = vmatpush1.bf16.msra.mxu0 %v604
        %613 = vmatprep.subr.bf16.mxu0 0
        %614 = vmatpush1.bf16.msra.mxu0 %v605
        %615 = vmatprep.subr.bf16.mxu0 0
        %616 = vmatpush1.bf16.msra.mxu0 0
        %617 = vmatprep.subr.bf16.mxu0 0
        %618 = vmatpush1.bf16.msra.mxu0 0
        %619 = vmatprep.subr.bf16.mxu0 0
        %620 = vmatpush1.bf16.msra.mxu0 0
        %621 = vmatprep.subr.bf16.mxu0 0
        %622 = vmatpush1.bf16.msra.mxu0 0
        %623 = vmatprep.subr.bf16.mxu0 0
        %624 = vmatpush1.bf16.msra.mxu0 0
        %625 = vmatprep.subr.bf16.mxu0 0
        %626 = vmatpush1.bf16.msra.mxu0 0
        %627 = vmatprep.subr.bf16.mxu0 0
        %628 = vmatpush1.bf16.msra.mxu0 0
        %629 = vmatprep.subr.bf16.mxu0 0
        %630 = vmatpush1.bf16.msra.mxu0 0
        %631 = vmatprep.subr.bf16.mxu0 0
        %632 = vmatpush1.bf16.msra.mxu0 0
        %633 = vmatprep.subr.bf16.mxu0 0
        %634 = vmatpush1.bf16.msra.mxu0 0
        %635 = vmatprep.subr.bf16.mxu0 0
        %636 = vmatpush1.bf16.msra.mxu0 0
        %637 = vmatprep.subr.bf16.mxu0 0
        %638 = vmatpush1.bf16.msra.mxu0 0
        %639 = vmatprep.subr.bf16.mxu0 0
        %640 = vmatpush1.bf16.msra.mxu0 0
        %641 = vmatprep.subr.bf16.mxu0 0
        %642 = vmatpush1.bf16.msra.mxu0 0
        %643 = vmatprep.mubr.bf16.mxu0 0
        %644 = vmatmul.mubr.bf16.gmra.mrb[0].mxu0 %v609
        %v645 = vpop.f32.mrb[0].mxu0
        %v646 = vadd.f32 %v595, %v645
        %v647 = vpop.f32.mrb[0].mxu0
        %v648 = vpop.f32.mrb[0].mxu0
        %v649 = vpop.f32.mrb[0].mxu0
        %650 = vdwg.mxu0
        %v651 = vadd.f32 %v586, %v646
        %v652 = vxor.u32 %v651, 2147483648
        %v653 = vmul.f32 %v652, 1.442695
        %v654 = vpow.pop %v653
        %v655 = vadd.f32 %v654, 1.0
        %v656 = vrcp.pop %v655
        %v657 = vmul.f32 1.0, %v656
        %659 = vrot.lane.b32.xlu0 %v646, 64
        %v660 = vpop.permute.xlu0 %659
        %v662 = vmul.f32 %v657, %v660
        %664 = vrot.lane.b32.xlu0 %v662, 64
        %v665 = vpop.permute.xlu0 %664
        %v667 = vadd.f32 %v586, %v665
        %v668 = vtanh.pop %v667
        %v669 = vsub.f32 1.0, %v657
        %671 = vrot.lane.b32.xlu0 %v668, 96
        %v672 = vpop.permute.xlu0 %671
        %v674 = vmul.f32 %v669, %v672
        %676 = vrot.lane.b32.xlu0 %v413, 32
        %v677 = vpop.permute.xlu0 %676
        %v679 = vmul.f32 %v657, %v677
        %v680 = vadd.f32 %v674, %v679
        %v681 = vpack.c.bf16 %v680, %v680
        %v682 = vlaneseq
        %v683 = vshrl.u32 %v682, 7
        %v684 = vsub.s32 0, %v683
        %v685 = vrot.slane %v410, %v684
        %687 = vrot.lane.b32.xlu0 %v681, 96
        %v688 = vpop.permute.xlu0 %687
        %v693 = vunpack.c.l.b16 %v375
        %v694 = vunpack.c.l.b16 %v376
        %v695 = vunpack.c.l.b16 %v377
        %v696 = vunpack.c.l.b16 %v378
        %v697 = vpack.c.b16 %v694, %v693
        %v698 = vpack.c.b16 %v696, %v695
        %v702 = vsel %vm487, %v688, 0
        %704 = vmatprep.subr.bf16.mxu0 0
        %705 = vmatpush1.bf16.msra.mxu0 %v697
        %706 = vmatprep.subr.bf16.mxu0 0
        %707 = vmatpush1.bf16.msra.mxu0 %v698
        %708 = vmatprep.subr.bf16.mxu0 0
        %709 = vmatpush1.bf16.msra.mxu0 0
        %710 = vmatprep.subr.bf16.mxu0 0
        %711 = vmatpush1.bf16.msra.mxu0 0
        %712 = vmatprep.subr.bf16.mxu0 0
        %713 = vmatpush1.bf16.msra.mxu0 0
        %714 = vmatprep.subr.bf16.mxu0 0
        %715 = vmatpush1.bf16.msra.mxu0 0
        %716 = vmatprep.subr.bf16.mxu0 0
        %717 = vmatpush1.bf16.msra.mxu0 0
        %718 = vmatprep.subr.bf16.mxu0 0
        %719 = vmatpush1.bf16.msra.mxu0 0
        %720 = vmatprep.subr.bf16.mxu0 0
        %721 = vmatpush1.bf16.msra.mxu0 0
        %722 = vmatprep.subr.bf16.mxu0 0
        %723 = vmatpush1.bf16.msra.mxu0 0
        %724 = vmatprep.subr.bf16.mxu0 0
        %725 = vmatpush1.bf16.msra.mxu0 0
        %726 = vmatprep.subr.bf16.mxu0 0
        %727 = vmatpush1.bf16.msra.mxu0 0
        %728 = vmatprep.subr.bf16.mxu0 0
        %729 = vmatpush1.bf16.msra.mxu0 0
        %730 = vmatprep.subr.bf16.mxu0 0
        %731 = vmatpush1.bf16.msra.mxu0 0
        %732 = vmatprep.subr.bf16.mxu0 0
        %733 = vmatpush1.bf16.msra.mxu0 0
        %734 = vmatprep.subr.bf16.mxu0 0
        %735 = vmatpush1.bf16.msra.mxu0 0
        %736 = vmatprep.mubr.bf16.mxu0 0
        %737 = vmatmul.mubr.bf16.gmra.mrb[0].mxu0 %v702
        %v738 = vpop.f32.mrb[0].mxu0
        %v739 = vadd.f32 %v685, %v738
        %v740 = vpop.f32.mrb[0].mxu0
        %v741 = vpop.f32.mrb[0].mxu0
        %v742 = vpop.f32.mrb[0].mxu0
        %743 = vdwg.mxu0
        %v744 = vmul.f32 %v739, %v739
        %v745 = vsel %vm425, %v744, 0.0
        %746 = vadd.xlane.f32.xlu0 %v745
        %v747 = vpop.xlane.xlu0 %746
        %v748 = vmax.f32 %v747, 1e-24
        %v749 = vrsqrt.pop %v748
        %v750 = vmul.f32 %v739, %v749
        %s751 = sld [smem:[#allocation5]]
        %s752 = sadd.s32 %s751, %s26
        %p753 = scmp.ge.s32.totalorder %s752, 3
        // Predicated region
        $region57: #{_rollout_device.1} parent=47 // pred_check
          %p754 = pneg %p753
        $region58: #{_rollout_device.1} parent=47 // pred_check_branch
          %756 = sbr.rel (%p754) target = $region60
        $region59: #{_rollout_device.1} parent=47 // pred_region
          %v757 = vld [vmem:[#allocation10] sm:$0xff]
          %v758 = vld [vmem:[#allocation9] sm:$0xff]
          %v759 = vsub.f32 %v757, %v758
          %760 = vst.msk [vmem:[#allocation10] sm:$0xff] %vm425, %v759
        $region60: #{_rollout_device.1} parent=47 // pred_fallthru
          _
        %s761 = scalar_lea.vmem [#allocation9], 8
        %v762 = vld [vmem:[%s761] sm:$0xff]
        %v763 = vld [vmem:[%s761 + $0x8] sm:$0xff]
        %764 = vst.msk [vmem:[#allocation9] sm:$0xff] %vm425, %v762
        %765 = vst.msk [vmem:[#allocation9 + $0x8] sm:$0xff] %vm425, %v763
        %s766 = scalar_lea.vmem [#allocation9], 16
        %767 = vst.msk [vmem:[%s766] sm:$0xff] %vm425, %v750
        %v768 = vld [vmem:[#allocation10] sm:$0xff]
        %v769 = vadd.f32 %v768, %v750
        %770 = vst.msk [vmem:[#allocation10] sm:$0xff] %vm425, %v769
        %s771 = sadd.s32 %s752, 1
        %p772 = scmp.lt.s32.totalorder %s771, 3
        %s773 = scalar_select %p772, %s771, 3
        %s774 = scvt.s32.f32 %s773
        %v775 = vld [vmem:[#allocation10] sm:$0xff]
        %v776 = vstv %s774
        %v777 = vrcp.pop %v776
        %v778 = vmul.f32 %v775, %v777
        %v779 = vpack.c.bf16 %v414, %v414
        %v780 = vlaneseq
        %v781 = vshrl.u32 %v780, 7
        %v782 = vsub.s32 0, %v781
        %v783 = vrot.slane %v409, %v782
        %v788 = vunpack.c.l.b16 %v379
        %v789 = vunpack.c.l.b16 %v380
        %v790 = vunpack.c.l.b16 %v381
        %v791 = vunpack.c.l.b16 %v382
        %v792 = vpack.c.b16 %v789, %v788
        %v793 = vpack.c.b16 %v791, %v790
        %v797 = vsel %vm487, %v779, 0
        %799 = vmatprep.subr.bf16.mxu0 0
        %800 = vmatpush1.bf16.msra.mxu0 %v792
        %801 = vmatprep.subr.bf16.mxu0 0
        %802 = vmatpush1.bf16.msra.mxu0 %v793
        %803 = vmatprep.subr.bf16.mxu0 0
        %804 = vmatpush1.bf16.msra.mxu0 0
        %805 = vmatprep.subr.bf16.mxu0 0
        %806 = vmatpush1.bf16.msra.mxu0 0
        %807 = vmatprep.subr.bf16.mxu0 0
        %808 = vmatpush1.bf16.msra.mxu0 0
        %809 = vmatprep.subr.bf16.mxu0 0
        %810 = vmatpush1.bf16.msra.mxu0 0
        %811 = vmatprep.subr.bf16.mxu0 0
        %812 = vmatpush1.bf16.msra.mxu0 0
        %813 = vmatprep.subr.bf16.mxu0 0
        %814 = vmatpush1.bf16.msra.mxu0 0
        %815 = vmatprep.subr.bf16.mxu0 0
        %816 = vmatpush1.bf16.msra.mxu0 0
        %817 = vmatprep.subr.bf16.mxu0 0
        %818 = vmatpush1.bf16.msra.mxu0 0
        %819 = vmatprep.subr.bf16.mxu0 0
        %820 = vmatpush1.bf16.msra.mxu0 0
        %821 = vmatprep.subr.bf16.mxu0 0
        %822 = vmatpush1.bf16.msra.mxu0 0
        %823 = vmatprep.subr.bf16.mxu0 0
        %824 = vmatpush1.bf16.msra.mxu0 0
        %825 = vmatprep.subr.bf16.mxu0 0
        %826 = vmatpush1.bf16.msra.mxu0 0
        %827 = vmatprep.subr.bf16.mxu0 0
        %828 = vmatpush1.bf16.msra.mxu0 0
        %829 = vmatprep.subr.bf16.mxu0 0
        %830 = vmatpush1.bf16.msra.mxu0 0
        %831 = vmatprep.mubr.bf16.mxu0 0
        %832 = vmatmul.mubr.bf16.gmra.mrb[0].mxu0 %v797
        %v833 = vpop.f32.mrb[0].mxu0
        %v834 = vadd.f32 %v783, %v833
        %v835 = vpop.f32.mrb[0].mxu0
        %v836 = vpop.f32.mrb[0].mxu0
        %v837 = vpop.f32.mrb[0].mxu0
        %838 = vdwg.mxu0
        %840 = vrot.lane.b32.xlu0 %v834, 32
        %v841 = vpop.permute.xlu0 %840
        %v843 = vadd.f32 %v526, %v841
        %v844 = vxor.u32 %v843, 2147483648
        %v845 = vmul.f32 %v844, 1.442695
        %v846 = vpow.pop %v845
        %v847 = vadd.f32 %v846, 1.0
        %v848 = vrcp.pop %v847
        %v849 = vmul.f32 1.0, %v848
        %850 = vrot.lane.b32.xlu0 %v834, 96
        %v851 = vpop.permute.xlu0 %850
        %v853 = vmul.f32 %v849, %v851
        %855 = vrot.lane.b32.xlu0 %v853, 64
        %v856 = vpop.permute.xlu0 %855
        %v858 = vadd.f32 %v526, %v856
        %v859 = vtanh.pop %v858
        %v860 = vsub.f32 1.0, %v849
        %862 = vrot.lane.b32.xlu0 %v859, 96
        %v863 = vpop.permute.xlu0 %862
        %v865 = vmul.f32 %v860, %v863
        %867 = vrot.lane.b32.xlu0 %v414, 64
        %v868 = vpop.permute.xlu0 %867
        %v870 = vmul.f32 %v849, %v868
        %v871 = vadd.f32 %v865, %v870
        %v872 = vpack.c.bf16 %v871, %v871
        %v873 = vlaneseq
        %v874 = vshrl.u32 %v873, 7
        %v875 = vsub.s32 0, %v874
        %v876 = vrot.slane %v411, %v875
        %878 = vrot.lane.b32.xlu0 %v872, 64
        %v879 = vpop.permute.xlu0 %878
        %v884 = vunpack.c.l.b16 %v383
        %v885 = vunpack.c.l.b16 %v384
        %v886 = vunpack.c.l.b16 %v385
        %v887 = vunpack.c.l.b16 %v386
        %v888 = vpack.c.b16 %v885, %v884
        %v889 = vpack.c.b16 %v887, %v886
        %v893 = vsel %vm487, %v879, 0
        %895 = vmatprep.subr.bf16.mxu0 0
        %896 = vmatpush1.bf16.msra.mxu0 %v888
        %897 = vmatprep.subr.bf16.mxu0 0
        %898 = vmatpush1.bf16.msra.mxu0 %v889
        %899 = vmatprep.subr.bf16.mxu0 0
        %900 = vmatpush1.bf16.msra.mxu0 0
        %901 = vmatprep.subr.bf16.mxu0 0
        %902 = vmatpush1.bf16.msra.mxu0 0
        %903 = vmatprep.subr.bf16.mxu0 0
        %904 = vmatpush1.bf16.msra.mxu0 0
        %905 = vmatprep.subr.bf16.mxu0 0
        %906 = vmatpush1.bf16.msra.mxu0 0
        %907 = vmatprep.subr.bf16.mxu0 0
        %908 = vmatpush1.bf16.msra.mxu0 0
        %909 = vmatprep.subr.bf16.mxu0 0
        %910 = vmatpush1.bf16.msra.mxu0 0
        %911 = vmatprep.subr.bf16.mxu0 0
        %912 = vmatpush1.bf16.msra.mxu0 0
        %913 = vmatprep.subr.bf16.mxu0 0
        %914 = vmatpush1.bf16.msra.mxu0 0
        %915 = vmatprep.subr.bf16.mxu0 0
        %916 = vmatpush1.bf16.msra.mxu0 0
        %917 = vmatprep.subr.bf16.mxu0 0
        %918 = vmatpush1.bf16.msra.mxu0 0
        %919 = vmatprep.subr.bf16.mxu0 0
        %920 = vmatpush1.bf16.msra.mxu0 0
        %921 = vmatprep.subr.bf16.mxu0 0
        %922 = vmatpush1.bf16.msra.mxu0 0
        %923 = vmatprep.subr.bf16.mxu0 0
        %924 = vmatpush1.bf16.msra.mxu0 0
        %925 = vmatprep.subr.bf16.mxu0 0
        %926 = vmatpush1.bf16.msra.mxu0 0
        %927 = vmatprep.mubr.bf16.mxu0 0
        %928 = vmatmul.mubr.bf16.gmra.mrb[0].mxu0 %v893
        %v929 = vpop.f32.mrb[0].mxu0
        %v930 = vadd.f32 %v876, %v929
        %v931 = vpop.f32.mrb[0].mxu0
        %v932 = vpop.f32.mrb[0].mxu0
        %v933 = vpop.f32.mrb[0].mxu0
        %934 = vdwg.mxu0
        %v935 = vpack.c.bf16 %v778, %v778
        %v938 = vunpack.c.l.b16 %v387
        %v939 = vunpack.c.l.b16 %v388
        %v940 = vpack.c.b16 %v939, %v938
        %v943 = vsel %vm425, %v935, 0
        %945 = vmatprep.subr.bf16.mxu0 0
        %946 = vmatpush1.bf16.msra.mxu0 %v940
        %947 = vmatprep.subr.bf16.mxu0 0
        %948 = vmatpush1.bf16.msra.mxu0 0
        %949 = vmatprep.subr.bf16.mxu0 0
        %950 = vmatpush1.bf16.msra.mxu0 0
        %951 = vmatprep.subr.bf16.mxu0 0
        %952 = vmatpush1.bf16.msra.mxu0 0
        %953 = vmatprep.subr.bf16.mxu0 0
        %954 = vmatpush1.bf16.msra.mxu0 0
        %955 = vmatprep.subr.bf16.mxu0 0
        %956 = vmatpush1.bf16.msra.mxu0 0
        %957 = vmatprep.subr.bf16.mxu0 0
        %958 = vmatpush1.bf16.msra.mxu0 0
        %959 = vmatprep.subr.bf16.mxu0 0
        %960 = vmatpush1.bf16.msra.mxu0 0
        %961 = vmatprep.subr.bf16.mxu0 0
        %962 = vmatpush1.bf16.msra.mxu0 0
        %963 = vmatprep.subr.bf16.mxu0 0
        %964 = vmatpush1.bf16.msra.mxu0 0
        %965 = vmatprep.subr.bf16.mxu0 0
        %966 = vmatpush1.bf16.msra.mxu0 0
        %967 = vmatprep.subr.bf16.mxu0 0
        %968 = vmatpush1.bf16.msra.mxu0 0
        %969 = vmatprep.subr.bf16.mxu0 0
        %970 = vmatpush1.bf16.msra.mxu0 0
        %971 = vmatprep.subr.bf16.mxu0 0
        %972 = vmatpush1.bf16.msra.mxu0 0
        %973 = vmatprep.subr.bf16.mxu0 0
        %974 = vmatpush1.bf16.msra.mxu0 0
        %975 = vmatprep.subr.bf16.mxu0 0
        %976 = vmatpush1.bf16.msra.mxu0 0
        %977 = vmatprep.mubr.bf16.mxu0 0
        %978 = vmatmul.mubr.bf16.gmra.mrb[0].mxu0 %v943
        %v979 = vpop.f32.mrb[0].mxu0
        %v980 = vadd.f32 0.0, %v979
        %v981 = vpop.f32.mrb[0].mxu0
        %v982 = vpop.f32.mrb[0].mxu0
        %v983 = vpop.f32.mrb[0].mxu0
        %984 = vdwg.mxu0
        %v985 = vmul.f32 %v930, %v980
        %v986 = vpack.c.bf16 %v985, %v985
        %v1003 = vunpack.c.l.b16 %v389
        %v1004 = vunpack.c.l.b16 %v390
        %v1005 = vunpack.c.l.b16 %v391
        %v1006 = vunpack.c.l.b16 %v392
        %v1007 = vunpack.c.l.b16 %v393
        %v1008 = vunpack.c.l.b16 %v394
        %v1009 = vunpack.c.l.b16 %v395
        %v1010 = vunpack.c.l.b16 %v396
        %v1011 = vunpack.c.l.b16 %v397
        %v1012 = vunpack.c.l.b16 %v398
        %v1013 = vunpack.c.l.b16 %v399
        %v1014 = vunpack.c.l.b16 %v400
        %v1015 = vunpack.c.l.b16 %v401
        %v1016 = vunpack.c.l.b16 %v402
        %v1017 = vunpack.c.l.b16 %v403
        %v1018 = vunpack.c.l.b16 %v404
        %v1019 = vpack.c.b16 %v1004, %v1003
        %v1020 = vpack.c.b16 %v1006, %v1005
        %v1021 = vpack.c.b16 %v1008, %v1007
        %v1022 = vpack.c.b16 %v1010, %v1009
        %v1023 = vpack.c.b16 %v1012, %v1011
        %v1024 = vpack.c.b16 %v1014, %v1013
        %v1025 = vpack.c.b16 %v1016, %v1015
        %v1026 = vpack.c.b16 %v1018, %v1017
        %1035 = vmatprep.subr.bf16.mxu0 0
        %1036 = vmatpush1.bf16.msra.mxu0 %v1019
        %1037 = vmatprep.subr.bf16.mxu0 0
        %1038 = vmatpush1.bf16.msra.mxu0 %v1020
        %1039 = vmatprep.subr.bf16.mxu0 0
        %1040 = vmatpush1.bf16.msra.mxu0 %v1021
        %1041 = vmatprep.subr.bf16.mxu0 0
        %1042 = vmatpush1.bf16.msra.mxu0 %v1022
        %1043 = vmatprep.subr.bf16.mxu0 0
        %1044 = vmatpush1.bf16.msra.mxu0 %v1023
        %1045 = vmatprep.subr.bf16.mxu0 0
        %1046 = vmatpush1.bf16.msra.mxu0 %v1024
        %1047 = vmatprep.subr.bf16.mxu0 0
        %1048 = vmatpush1.bf16.msra.mxu0 %v1025
        %1049 = vmatprep.subr.bf16.mxu0 0
        %1050 = vmatpush1.bf16.msra.mxu0 %v1026
        %1051 = vmatprep.subr.bf16.mxu0 0
        %1052 = vmatpush1.bf16.msra.mxu0 0
        %1053 = vmatprep.subr.bf16.mxu0 0
        %1054 = vmatpush1.bf16.msra.mxu0 0
        %1055 = vmatprep.subr.bf16.mxu0 0
        %1056 = vmatpush1.bf16.msra.mxu0 0
        %1057 = vmatprep.subr.bf16.mxu0 0
        %1058 = vmatpush1.bf16.msra.mxu0 0
        %1059 = vmatprep.subr.bf16.mxu0 0
        %1060 = vmatpush1.bf16.msra.mxu0 0
        %1061 = vmatprep.subr.bf16.mxu0 0
        %1062 = vmatpush1.bf16.msra.mxu0 0
        %1063 = vmatprep.subr.bf16.mxu0 0
        %1064 = vmatpush1.bf16.msra.mxu0 0
        %1065 = vmatprep.subr.bf16.mxu0 0
        %1066 = vmatpush1.bf16.msra.mxu0 0
        %1067 = vmatprep.mubr.bf16.mxu0 0
        %1068 = vmatmul.mubr.bf16.gmra.mrb[0].mxu0 %v986
        %v1069 = vpop.f32.mrb[0].mxu0
        %v1070 = vadd.f32 0.0, %v1069
        %v1071 = vpop.f32.mrb[0].mxu0
        %v1072 = vpop.f32.mrb[0].mxu0
        %v1073 = vpop.f32.mrb[0].mxu0
        %1074 = vdwg.mxu0
        %1076 = vrot.lane.b32.xlu0 %v680, 96
        %v1077 = vpop.permute.xlu0 %1076
        %1079 = vst.msk [vmem:[#allocation2] sm:$0xff] %vm487, %v1077
        %1081 = vrot.lane.b32.xlu0 %v871, 64
        %v1082 = vpop.permute.xlu0 %1081
        %1084 = vst.msk [vmem:[#allocation3] sm:$0xff] %vm487, %v1082
        %1085 = vrot.lane.b32.xlu0 %v871, 96
        %v1086 = vpop.permute.xlu0 %1085
        %1089 = vrot.lane.b32.xlu0 %v750, 64
        %v1090 = vpop.permute.xlu0 %1089
        %1093 = vrot.lane.b32.xlu0 %v1070, 80
        %v1094 = vpop.permute.xlu0 %1093
        %v1096 = vsel %vm487, %v1077, %v1086
        %vm1097 = vcmask 523264
        %v1098 = vsel %vm1097, %v1096, %v1090
        %vm1099 = vcmask 654336
        %v1100 = vsel %vm1099, %v1098, %v1094
        %vm1101 = vcmask 719872
        %v1102 = vsel %vm1101, %v1100, 0.0
        %1103 = vst [vmem:[%s341] sm:$0xff] %v1102
        %p1104 = scmp.lt.s32.totalorder %s26, 2
        %s1105 = scalar_select %p1104, %s26, 2
        %s1106 = smul.addr %s1105, 8
        %s1107 = scalar_lea.vmem %s8, %s1106
        // Predicated region
        $region61: #{_rollout_device.1} parent=47 // pred_check
          %p1108 = pneg %p196
        $region62: #{_rollout_device.1} parent=47 // pred_check_branch
          %1110 = sbr.rel (%p1108) target = $region64
        $region63: #{_rollout_device.1} parent=47 // pred_region
          _
        $region64: #{_rollout_device.1} parent=47 // pred_fallthru
          _
        // Predicated region
        $region65: #{_rollout_device.1} parent=47 // pred_check
          %p1111 = pneg %p217
        $region66: #{_rollout_device.1} parent=47 // pred_check_branch
          %1113 = sbr.rel (%p1111) target = $region68
        $region67: #{_rollout_device.1} parent=47 // pred_region
          %s1115 = ssub.s32 384, 384
          %1116 = vsyncadd [#allocation8], %s1115
          %s1117 = sshll.u32 [#allocation9], 4
          %s1118 = int_to_ptr.vmem [resolvable:$true] %s1117
          %1123 = dma.vmem_to_hbm [thread:$0]  %s1118, 384, %s9, [#allocation8], 128, 128, 8
        $region68: #{_rollout_device.1} parent=47 // pred_fallthru
          _
        // Predicated region
        $region69: #{_rollout_device.1} parent=47 // pred_check
          %p1124 = pneg %p238
        $region70: #{_rollout_device.1} parent=47 // pred_check_branch
          %1126 = sbr.rel (%p1124) target = $region72
        $region71: #{_rollout_device.1} parent=47 // pred_region
          %s1128 = ssub.s32 128, 128
          %1129 = vsyncadd [#allocation11], %s1128
          %s1131 = sshll.u32 [#allocation10], 4
          %s1132 = int_to_ptr.vmem [resolvable:$true] %s1131
          %1134 = dma.vmem_to_hbm [thread:$0]  %s1132, 128, %s10, [#allocation11]
        $region72: #{_rollout_device.1} parent=47 // pred_fallthru
          _
        // Predicated region
        $region73: #{_rollout_device.1} parent=47 // pred_check
          %p1135 = pneg %p217
        $region74: #{_rollout_device.1} parent=47 // pred_check_branch
          %1137 = sbr.rel (%p1135) target = $region76
        $region75: #{_rollout_device.1} parent=47 // pred_region
          %1138 = dma.done [#allocation8], 384
        $region76: #{_rollout_device.1} parent=47 // pred_fallthru
          _
        // Predicated region
        $region77: #{_rollout_device.1} parent=47 // pred_check
          %p1139 = pneg %p238
        $region78: #{_rollout_device.1} parent=47 // pred_check_branch
          %1141 = sbr.rel (%p1139) target = $region80
        $region79: #{_rollout_device.1} parent=47 // pred_region
          %1142 = dma.done [#allocation11], 128
        $region80: #{_rollout_device.1} parent=47 // pred_fallthru
          _
      $region48: #{_rollout_device.1} parent=5 // pred_fallthru
        _
      %p1143 = scmp.le.s32.totalorder 2, %s21
      // Predicated region
      $region81: #{_rollout_device.1} parent=5 // pred_check
        %p1144 = pneg %p1143
      $region82: #{_rollout_device.1} parent=5 // pred_check_branch
        %1146 = sbr.rel (%p1144) target = $region84
      $region83: #{_rollout_device.1} parent=5 // pred_region
        %s1147 = ssub.s32 %s21, 2
        // Predicated region
        $region85: #{_rollout_device.1} parent=83 // pred_check
          %p1148 = pneg %p202
        $region86: #{_rollout_device.1} parent=83 // pred_check_branch
          %1150 = sbr.rel (%p1148) target = $region88
        $region87: #{_rollout_device.1} parent=83 // pred_region
          %p1151 = scmp.lt.s32.totalorder %s27, 2
          %s1152 = scalar_select %p1151, %s27, 2
          %s1153 = smul.addr %s1152, 8
          %s1154 = scalar_lea.vmem %s8, %s1153
        $region88: #{_rollout_device.1} parent=83 // pred_fallthru
          _
      $region84: #{_rollout_device.1} parent=5 // pred_fallthru
        _
    $region6: #{_rollout_device.1} parent=1 // loop_footer
      %s25 = sadd.s32 1, %s21
    $region7: #{_rollout_device.1} parent=1 // loop_footer_branch
      %20 = sbr.rel target = $region3
    $region8: #{_rollout_device.1} parent=1 // loop_exit
      _
    %1155 = vsyncpa [#allocation7], 1
    %s1156 = scalar_lea.sflag [#allocation7], 1
    %1157 = vsyncpa %s1156, 1
    %1158 = vsyncpa [#allocation8], 1
    %s1159 = scalar_lea.sflag [#allocation8], 1
    %1160 = vsyncpa %s1159, 1
    %1161 = vsyncpa [#allocation11], 1

</llo_original>
